<compile_context>
chip_gen: v5e
topology: v5e:2x2
jax: 0.10.0
libtpu: 0.0.40
codegen_flags: <defaults>
</compile_context>

<pallas_src>
import functools

import jax
import jax.numpy as jnp
from jax.experimental import pallas as pl
from jax.experimental.pallas import tpu as pltpu


GATE_BLOCK = 128  # each gate gets its own 128-lane block


# ------------------------------ fused kernel --------------------------------

def make_fused_gru_kernel(T, B, H, FUT, num_layers, GB):
    """Fused wavefront GRU(+FC) kernel for static (T, B, H, FUT, num_layers)."""
    n_extra = num_layers - 1

    def kernel(*refs):
        x_ref, wih0_ref, bi0_ref, whh0_ref, bh0_ref = refs[:5]
        comb_refs = refs[5:5 + 2 * n_extra]
        fcw_ref, fcb_ref, out_ref = refs[5 + 2 * n_extra:]

        # ---- hoisted layer-0 input projection: ONE matmul for all T steps ----
        # gi0[:, 0:GB)=r, [GB:2GB)=z, [2GB:3GB)=n ; biases (b_ir+b_hr, b_iz+b_hz,
        # b_in) already folded in at pack time.
        x = x_ref[...]
        gi0 = (jnp.dot(x, wih0_ref[...], preferred_element_type=jnp.float32)
               + bi0_ref[...])

        # Hoist loop-invariant weight/bias loads out of the recurrence.
        whh0 = whh0_ref[...]                       # (H, 3*GB)
        bh0 = bh0_ref[...]                         # (1, 3*GB)  [0 | 0 | b_hn]
        wcs = [comb_refs[2 * i][...] for i in range(n_extra)]      # (2H, 4*GB)
        bcs = [comb_refs[2 * i + 1][...] for i in range(n_extra)]  # (1, 4*GB)

        def cell0(h_prev, t):
            # Single fused recurrent matmul: all three gate blocks at once.
            lo = t * B
            gh = jnp.dot(h_prev, whh0, preferred_element_type=jnp.float32) + bh0
            # One sigmoid over the adjacent r|z lane blocks (B, 2*GB).
            rz = jax.nn.sigmoid(gi0[lo:lo + B, :2 * GB] + gh[:, :2 * GB])
            r = rz[:, :H]
            z = rz[:, GB:GB + H]
            n = jnp.tanh(gi0[lo:lo + B, 2 * GB:2 * GB + H]
                         + r * gh[:, 2 * GB:2 * GB + H])
            return (1.0 - z) * n + z * h_prev

        def cell_comb(x_t, h_prev, wc, bc):
            # Fused input-proj + recurrent matmul: [x_t | h_prev] @ (2H, 4*GB)
            # with blocks [r_sum | z_sum | gi_n | gh_n].
            xh = jnp.concatenate([x_t, h_prev], axis=1)           # (B, 2H)
            g = jnp.dot(xh, wc, preferred_element_type=jnp.float32) + bc
            rz = jax.nn.sigmoid(g[:, :2 * GB])                    # one sigmoid
            r = rz[:, :H]
            z = rz[:, GB:GB + H]
            n = jnp.tanh(g[:, 2 * GB:2 * GB + H] + r * g[:, 3 * GB:3 * GB + H])
            return (1.0 - z) * n + z * h_prev

        # ---- wavefront schedule: layer l at step s processes t = s - l ------
        h = [jnp.zeros((B, H), jnp.float32) for _ in range(num_layers)]  # h0=0
        prev_out = [None] * num_layers   # layer-l output from the previous step
        tail = []                        # last-layer h for the last FUT steps

        for s in range(T + num_layers - 1):
            new_prev = list(prev_out)
            if s < T:
                h[0] = cell0(h[0], s)
                new_prev[0] = h[0]
                if num_layers == 1 and s >= T - FUT:
                    tail.append(h[0])
            for l in range(1, num_layers):
                t = s - l
                if 0 <= t < T:
                    # consumes layer (l-1)'s output of the PREVIOUS step (= h_{l-1,t})
                    h[l] = cell_comb(prev_out[l - 1], h[l], wcs[l - 1], bcs[l - 1])
                    new_prev[l] = h[l]
                    if l == num_layers - 1 and t >= T - FUT:
                        tail.append(h[l])
            prev_out = new_prev

        # ---- fused FC over the last FUT timesteps, lane-dense output --------
        tail_mat = jnp.concatenate(tail, axis=0)                  # (FUT*B, H)
        preds = (jnp.dot(tail_mat, fcw_ref[...],
                         preferred_element_type=jnp.float32) + fcb_ref[...])
        out_ref[...] = preds                                      # (FUT*B, 128)

    return kernel


# ------------------------------ forward wrapper ------------------------------

@functools.partial(jax.jit, static_argnums=(2, 3))
def gru_forward(x, packed, future, output_dim):
    """x: (B, T, D) batch_first, like the PyTorch module. Returns (B, future, O)."""
    wih0, bi0, whh0, bh0, comb, fcw, fcb = packed
    B, T, D = x.shape
    H = whh0.shape[0]
    num_layers = 1 + len(comb)
    GB = GATE_BLOCK

    # Time-major rows (row = t*B + b) so the layer-0 input projection is one
    # big matmul over all timesteps.  Tiny wrapper-side relayout.
    x2d = jnp.transpose(x, (1, 0, 2)).reshape(T * B, D)

    flat = [x2d, wih0, bi0, whh0, bh0]
    for (wc, bc) in comb:
        flat += [wc, bc]
    flat += [fcw, fcb]

    kernel = make_fused_gru_kernel(T, B, H, future, num_layers, GB)
    preds = pl.pallas_call(
        kernel,
        out_shape=jax.ShapeDtypeStruct((future * B, GB), jnp.float32),
        in_specs=[pl.BlockSpec(memory_space=pltpu.MemorySpace.VMEM) for _ in flat],
        out_specs=pl.BlockSpec(memory_space=pltpu.MemorySpace.VMEM),
    )(*flat)

    # Rows are time-major (t, b); strip lane padding and rearrange to (B, F, O).
    return preds[:, :output_dim].reshape(future, B, output_dim).transpose(1, 0, 2)


# ------------------------- parameter init / packing --------------------------

def init_params(key, input_dim, hidden_dim, output_dim, num_layers):
    """PyTorch-shaped params: W_ih (3H, D_l), W_hh (3H, H), biases (3H,)."""
    H = hidden_dim
    bound = 1.0 / jnp.sqrt(jnp.float32(H))
    layers = []
    for l in range(num_layers):
        in_d = input_dim if l == 0 else hidden_dim
        key, k1, k2, k3, k4 = jax.random.split(key, 5)
        w_ih = jax.random.uniform(k1, (3 * H, in_d), jnp.float32, -bound, bound)
        w_hh = jax.random.uniform(k2, (3 * H, H), jnp.float32, -bound, bound)
        b_ih = jax.random.uniform(k3, (3 * H,), jnp.float32, -bound, bound)
        b_hh = jax.random.uniform(k4, (3 * H,), jnp.float32, -bound, bound)
        layers.append((w_ih, w_hh, b_ih, b_hh))
    key, k5, k6 = jax.random.split(key, 3)
    fc_w = jax.random.uniform(k5, (output_dim, hidden_dim), jnp.float32, -bound, bound)
    fc_b = jax.random.uniform(k6, (output_dim,), jnp.float32, -bound, bound)
    return layers, fc_w, fc_b


def pack_params(layers, fc_w, fc_b, hidden_dim, output_dim, GB=GATE_BLOCK):
    """PyTorch-shaped params -> 128-lane gate-blocked kernel layout."""
    H = hidden_dim

    # Layer 0: hoisted input projection weights (D, 3*GB) + recurrent (H, 3*GB).
    w_ih0, w_hh0, b_ih0, b_hh0 = layers[0]
    D0 = w_ih0.shape[1]
    wih0 = jnp.zeros((D0, 3 * GB), jnp.float32)
    whh0 = jnp.zeros((H, 3 * GB), jnp.float32)
    bi0 = jnp.zeros((1, 3 * GB), jnp.float32)
    bh0 = jnp.zeros((1, 3 * GB), jnp.float32)
    for g in range(3):
        wih0 = wih0.at[:, g * GB:g * GB + H].set(w_ih0[g * H:(g + 1) * H, :].T)
        whh0 = whh0.at[:, g * GB:g * GB + H].set(w_hh0[g * H:(g + 1) * H, :].T)
    bi0 = bi0.at[0, 0:H].set(b_ih0[0:H] + b_hh0[0:H])                 # r
    bi0 = bi0.at[0, GB:GB + H].set(b_ih0[H:2 * H] + b_hh0[H:2 * H])   # z
    bi0 = bi0.at[0, 2 * GB:2 * GB + H].set(b_ih0[2 * H:3 * H])        # b_in
    bh0 = bh0.at[0, 2 * GB:2 * GB + H].set(b_hh0[2 * H:3 * H])        # b_hn

    # Layers l>=1: combined [W_ih; W_hh] (2H, 4*GB), blocks [r_sum|z_sum|gi_n|gh_n].
    comb = []
    for (w_ih, w_hh, b_ih, b_hh) in layers[1:]:
        wc = jnp.zeros((2 * H, 4 * GB), jnp.float32)
        bc = jnp.zeros((1, 4 * GB), jnp.float32)
        wc = wc.at[:H, 0:H].set(w_ih[0:H, :].T)                       # r (input)
        wc = wc.at[H:, 0:H].set(w_hh[0:H, :].T)                       # r (hidden)
        wc = wc.at[:H, GB:GB + H].set(w_ih[H:2 * H, :].T)             # z (input)
        wc = wc.at[H:, GB:GB + H].set(w_hh[H:2 * H, :].T)             # z (hidden)
        wc = wc.at[:H, 2 * GB:2 * GB + H].set(w_ih[2 * H:3 * H, :].T) # gi_n
        wc = wc.at[H:, 3 * GB:3 * GB + H].set(w_hh[2 * H:3 * H, :].T) # gh_n
        bc = bc.at[0, 0:H].set(b_ih[0:H] + b_hh[0:H])
        bc = bc.at[0, GB:GB + H].set(b_ih[H:2 * H] + b_hh[H:2 * H])
        bc = bc.at[0, 2 * GB:2 * GB + H].set(b_ih[2 * H:3 * H])
        bc = bc.at[0, 3 * GB:3 * GB + H].set(b_hh[2 * H:3 * H])
        comb.append((wc, bc))

    # FC, padded to 128 output lanes for an unmasked lane-dense store.
    fcw = jnp.zeros((H, GB), jnp.float32).at[:, :output_dim].set(fc_w.T)
    fcb = jnp.zeros((1, GB), jnp.float32).at[0, :output_dim].set(fc_b)
    return (wih0, bi0, whh0, bh0, tuple(comb), fcw, fcb)


# -------------------------- pure-JAX reference check -------------------------

def gru_forward_ref(x, layers, fc_w, fc_b, future):
    h_seq = jnp.transpose(x, (1, 0, 2))  # (T, B, D)
    for (w_ih, w_hh, b_ih, b_hh) in layers:
        H = w_hh.shape[1]
        B = h_seq.shape[1]

        def step(h_prev, x_t):
            gi = x_t @ w_ih.T + b_ih
            gh = h_prev @ w_hh.T + b_hh
            r = jax.nn.sigmoid(gi[:, :H] + gh[:, :H])
            z = jax.nn.sigmoid(gi[:, H:2 * H] + gh[:, H:2 * H])
            n = jnp.tanh(gi[:, 2 * H:] + r * gh[:, 2 * H:])
            h_new = (1.0 - z) * n + z * h_prev
            return h_new, h_new

        _, h_seq = jax.lax.scan(step, jnp.zeros((B, H), jnp.float32), h_seq)
    tail = jnp.transpose(h_seq[-future:], (1, 0, 2))  # (B, future, H)
    B, F, H = tail.shape
    preds = tail.reshape(B * F, H) @ fc_w.T + fc_b
    return preds.reshape(B, F, -1)


if __name__ == "__main__":
    # Shapes consistent with the module: batch=2, seq=8, input_dim=8,
    # hidden_dim=32, num_layers=2, output_dim=4, future=4, bi=False.
    B, T, D, H, L, O, FUT = 2, 8, 8, 32, 2, 4, 4

    key = jax.random.PRNGKey(0)
    kx, kp = jax.random.split(key)
    x = jax.random.normal(kx, (B, T, D), jnp.float32)

    layers, fc_w, fc_b = init_params(kp, D, H, O, L)
    packed = pack_params(layers, fc_w, fc_b, H, O)

    out = gru_forward(x, packed, FUT, O)
    out = jax.block_until_ready(out)

    ref = gru_forward_ref(x, layers, fc_w, fc_b, FUT)
    assert out.shape == (B, FUT, O), out.shape
    assert jnp.allclose(out, ref, rtol=1e-2, atol=1e-2), "mismatch vs reference"

    print("KERNEL_OK")
</pallas_src>

<mosaic_0001>
module attributes {stable_mosaic.version = 11 : i64} {
  func.func @kernel(%arg0: memref<16x8xf32, #tpu.memory_space<vmem>>, %arg1: memref<8x384xf32, #tpu.memory_space<vmem>>, %arg2: memref<1x384xf32, #tpu.memory_space<vmem>>, %arg3: memref<32x384xf32, #tpu.memory_space<vmem>>, %arg4: memref<1x384xf32, #tpu.memory_space<vmem>>, %arg5: memref<64x512xf32, #tpu.memory_space<vmem>>, %arg6: memref<1x512xf32, #tpu.memory_space<vmem>>, %arg7: memref<32x128xf32, #tpu.memory_space<vmem>>, %arg8: memref<1x128xf32, #tpu.memory_space<vmem>>, %arg9: memref<8x128xf32, #tpu.memory_space<vmem>>) attributes {dimension_semantics = [], scalar_prefetch = 0 : i64, scratch_operands = 0 : i64, tpu.core_type = #tpu.core_type<tc>} {
    %c0 = arith.constant 0 : index
    %c0_0 = arith.constant 0 : index
    %0 = vector.load %arg0[%c0, %c0_0] : memref<16x8xf32, #tpu.memory_space<vmem>>, vector<16x8xf32>
    %c0_1 = arith.constant 0 : index
    %c0_2 = arith.constant 0 : index
    %1 = vector.load %arg1[%c0_1, %c0_2] : memref<8x384xf32, #tpu.memory_space<vmem>>, vector<8x384xf32>
    %cst = arith.constant dense<0.000000e+00> : vector<16x384xf32>
    %2 = tpu.matmul %0, %1, %cst {dimension_numbers = #tpu.dot_dimension_numbers<[1], [0], [0], [1], [0, 0, 1, 1], [], []>} : vector<16x8xf32>, vector<8x384xf32>, vector<16x384xf32> -> vector<16x384xf32>
    %c0_3 = arith.constant 0 : index
    %c0_4 = arith.constant 0 : index
    %3 = vector.load %arg2[%c0_3, %c0_4] : memref<1x384xf32, #tpu.memory_space<vmem>>, vector<1x384xf32>
    %4 = vector.broadcast %3 : vector<1x384xf32> to vector<16x384xf32>
    %5 = arith.addf %2, %4 : vector<16x384xf32>
    %c0_5 = arith.constant 0 : index
    %c0_6 = arith.constant 0 : index
    %6 = vector.load %arg3[%c0_5, %c0_6] : memref<32x384xf32, #tpu.memory_space<vmem>>, vector<32x384xf32>
    %c0_7 = arith.constant 0 : index
    %c0_8 = arith.constant 0 : index
    %7 = vector.load %arg4[%c0_7, %c0_8] : memref<1x384xf32, #tpu.memory_space<vmem>>, vector<1x384xf32>
    %c0_9 = arith.constant 0 : index
    %c0_10 = arith.constant 0 : index
    %8 = vector.load %arg5[%c0_9, %c0_10] : memref<64x512xf32, #tpu.memory_space<vmem>>, vector<64x512xf32>
    %c0_11 = arith.constant 0 : index
    %c0_12 = arith.constant 0 : index
    %9 = vector.load %arg6[%c0_11, %c0_12] : memref<1x512xf32, #tpu.memory_space<vmem>>, vector<1x512xf32>
    %cst_13 = arith.constant 0.000000e+00 : f32
    %10 = vector.broadcast %cst_13 : f32 to vector<2x32xf32>
    %cst_14 = arith.constant 0.000000e+00 : f32
    %11 = vector.broadcast %cst_14 : f32 to vector<2x32xf32>
    %cst_15 = arith.constant dense<0.000000e+00> : vector<2x384xf32>
    %12 = tpu.matmul %10, %6, %cst_15 {dimension_numbers = #tpu.dot_dimension_numbers<[1], [0], [0], [1], [0, 0, 1, 1], [], []>} : vector<2x32xf32>, vector<32x384xf32>, vector<2x384xf32> -> vector<2x384xf32>
    %13 = vector.broadcast %7 : vector<1x384xf32> to vector<2x384xf32>
    %14 = arith.addf %12, %13 : vector<2x384xf32>
    %15 = vector.extract_strided_slice %5 {offsets = [0, 0], sizes = [2, 256], strides = [1, 1]} : vector<16x384xf32> to vector<2x256xf32>
    %16 = vector.extract_strided_slice %14 {offsets = [0, 0], sizes = [2, 256], strides = [1, 1]} : vector<2x384xf32> to vector<2x256xf32>
    %17 = arith.addf %15, %16 : vector<2x256xf32>
    %18 = arith.negf %17 : vector<2x256xf32>
    %19 = math.exp %18 : vector<2x256xf32>
    %cst_16 = arith.constant 1.000000e+00 : f32
    %20 = vector.broadcast %cst_16 : f32 to vector<2x256xf32>
    %21 = arith.addf %20, %19 : vector<2x256xf32>
    %22 = arith.divf %20, %21 : vector<2x256xf32>
    %23 = vector.extract_strided_slice %22 {offsets = [0, 0], sizes = [2, 32], strides = [1, 1]} : vector<2x256xf32> to vector<2x32xf32>
    %24 = vector.extract_strided_slice %22 {offsets = [0, 128], sizes = [2, 32], strides = [1, 1]} : vector<2x256xf32> to vector<2x32xf32>
    %25 = vector.extract_strided_slice %5 {offsets = [0, 256], sizes = [2, 32], strides = [1, 1]} : vector<16x384xf32> to vector<2x32xf32>
    %26 = vector.extract_strided_slice %14 {offsets = [0, 256], sizes = [2, 32], strides = [1, 1]} : vector<2x384xf32> to vector<2x32xf32>
    %27 = arith.mulf %23, %26 : vector<2x32xf32>
    %28 = arith.addf %25, %27 : vector<2x32xf32>
    %29 = math.tanh %28 : vector<2x32xf32>
    %cst_17 = arith.constant 1.000000e+00 : f32
    %30 = vector.broadcast %cst_17 : f32 to vector<2x32xf32>
    %31 = arith.subf %30, %24 : vector<2x32xf32>
    %32 = arith.mulf %31, %29 : vector<2x32xf32>
    %33 = arith.mulf %24, %10 : vector<2x32xf32>
    %34 = arith.addf %32, %33 : vector<2x32xf32>
    %cst_18 = arith.constant dense<0.000000e+00> : vector<2x384xf32>
    %35 = tpu.matmul %34, %6, %cst_18 {dimension_numbers = #tpu.dot_dimension_numbers<[1], [0], [0], [1], [0, 0, 1, 1], [], []>} : vector<2x32xf32>, vector<32x384xf32>, vector<2x384xf32> -> vector<2x384xf32>
    %36 = vector.broadcast %7 : vector<1x384xf32> to vector<2x384xf32>
    %37 = arith.addf %35, %36 : vector<2x384xf32>
    %38 = vector.extract_strided_slice %5 {offsets = [2, 0], sizes = [2, 256], strides = [1, 1]} : vector<16x384xf32> to vector<2x256xf32>
    %39 = vector.extract_strided_slice %37 {offsets = [0, 0], sizes = [2, 256], strides = [1, 1]} : vector<2x384xf32> to vector<2x256xf32>
    %40 = arith.addf %38, %39 : vector<2x256xf32>
    %41 = arith.negf %40 : vector<2x256xf32>
    %42 = math.exp %41 : vector<2x256xf32>
    %cst_19 = arith.constant 1.000000e+00 : f32
    %43 = vector.broadcast %cst_19 : f32 to vector<2x256xf32>
    %44 = arith.addf %43, %42 : vector<2x256xf32>
    %45 = arith.divf %43, %44 : vector<2x256xf32>
    %46 = vector.extract_strided_slice %45 {offsets = [0, 0], sizes = [2, 32], strides = [1, 1]} : vector<2x256xf32> to vector<2x32xf32>
    %47 = vector.extract_strided_slice %45 {offsets = [0, 128], sizes = [2, 32], strides = [1, 1]} : vector<2x256xf32> to vector<2x32xf32>
    %48 = vector.extract_strided_slice %5 {offsets = [2, 256], sizes = [2, 32], strides = [1, 1]} : vector<16x384xf32> to vector<2x32xf32>
    %49 = vector.extract_strided_slice %37 {offsets = [0, 256], sizes = [2, 32], strides = [1, 1]} : vector<2x384xf32> to vector<2x32xf32>
    %50 = arith.mulf %46, %49 : vector<2x32xf32>
    %51 = arith.addf %48, %50 : vector<2x32xf32>
    %52 = math.tanh %51 : vector<2x32xf32>
    %cst_20 = arith.constant 1.000000e+00 : f32
    %53 = vector.broadcast %cst_20 : f32 to vector<2x32xf32>
    %54 = arith.subf %53, %47 : vector<2x32xf32>
    %55 = arith.mulf %54, %52 : vector<2x32xf32>
    %56 = arith.mulf %47, %34 : vector<2x32xf32>
    %57 = arith.addf %55, %56 : vector<2x32xf32>
    %58 = tpu.concatenate %34, %11 in 1 : vector<2x32xf32>, vector<2x32xf32> -> vector<2x64xf32>
    %cst_21 = arith.constant dense<0.000000e+00> : vector<2x512xf32>
    %59 = tpu.matmul %58, %8, %cst_21 {dimension_numbers = #tpu.dot_dimension_numbers<[1], [0], [0], [1], [0, 0, 1, 1], [], []>} : vector<2x64xf32>, vector<64x512xf32>, vector<2x512xf32> -> vector<2x512xf32>
    %60 = vector.broadcast %9 : vector<1x512xf32> to vector<2x512xf32>
    %61 = arith.addf %59, %60 : vector<2x512xf32>
    %62 = vector.extract_strided_slice %61 {offsets = [0, 0], sizes = [2, 256], strides = [1, 1]} : vector<2x512xf32> to vector<2x256xf32>
    %63 = arith.negf %62 : vector<2x256xf32>
    %64 = math.exp %63 : vector<2x256xf32>
    %cst_22 = arith.constant 1.000000e+00 : f32
    %65 = vector.broadcast %cst_22 : f32 to vector<2x256xf32>
    %66 = arith.addf %65, %64 : vector<2x256xf32>
    %67 = arith.divf %65, %66 : vector<2x256xf32>
    %68 = vector.extract_strided_slice %67 {offsets = [0, 0], sizes = [2, 32], strides = [1, 1]} : vector<2x256xf32> to vector<2x32xf32>
    %69 = vector.extract_strided_slice %67 {offsets = [0, 128], sizes = [2, 32], strides = [1, 1]} : vector<2x256xf32> to vector<2x32xf32>
    %70 = vector.extract_strided_slice %61 {offsets = [0, 256], sizes = [2, 32], strides = [1, 1]} : vector<2x512xf32> to vector<2x32xf32>
    %71 = vector.extract_strided_slice %61 {offsets = [0, 384], sizes = [2, 32], strides = [1, 1]} : vector<2x512xf32> to vector<2x32xf32>
    %72 = arith.mulf %68, %71 : vector<2x32xf32>
    %73 = arith.addf %70, %72 : vector<2x32xf32>
    %74 = math.tanh %73 : vector<2x32xf32>
    %cst_23 = arith.constant 1.000000e+00 : f32
    %75 = vector.broadcast %cst_23 : f32 to vector<2x32xf32>
    %76 = arith.subf %75, %69 : vector<2x32xf32>
    %77 = arith.mulf %76, %74 : vector<2x32xf32>
    %78 = arith.mulf %69, %11 : vector<2x32xf32>
    %79 = arith.addf %77, %78 : vector<2x32xf32>
    %cst_24 = arith.constant dense<0.000000e+00> : vector<2x384xf32>
    %80 = tpu.matmul %57, %6, %cst_24 {dimension_numbers = #tpu.dot_dimension_numbers<[1], [0], [0], [1], [0, 0, 1, 1], [], []>} : vector<2x32xf32>, vector<32x384xf32>, vector<2x384xf32> -> vector<2x384xf32>
    %81 = vector.broadcast %7 : vector<1x384xf32> to vector<2x384xf32>
    %82 = arith.addf %80, %81 : vector<2x384xf32>
    %83 = vector.extract_strided_slice %5 {offsets = [4, 0], sizes = [2, 256], strides = [1, 1]} : vector<16x384xf32> to vector<2x256xf32>
    %84 = vector.extract_strided_slice %82 {offsets = [0, 0], sizes = [2, 256], strides = [1, 1]} : vector<2x384xf32> to vector<2x256xf32>
    %85 = arith.addf %83, %84 : vector<2x256xf32>
    %86 = arith.negf %85 : vector<2x256xf32>
    %87 = math.exp %86 : vector<2x256xf32>
    %cst_25 = arith.constant 1.000000e+00 : f32
    %88 = vector.broadcast %cst_25 : f32 to vector<2x256xf32>
    %89 = arith.addf %88, %87 : vector<2x256xf32>
    %90 = arith.divf %88, %89 : vector<2x256xf32>
    %91 = vector.extract_strided_slice %90 {offsets = [0, 0], sizes = [2, 32], strides = [1, 1]} : vector<2x256xf32> to vector<2x32xf32>
    %92 = vector.extract_strided_slice %90 {offsets = [0, 128], sizes = [2, 32], strides = [1, 1]} : vector<2x256xf32> to vector<2x32xf32>
    %93 = vector.extract_strided_slice %5 {offsets = [4, 256], sizes = [2, 32], strides = [1, 1]} : vector<16x384xf32> to vector<2x32xf32>
    %94 = vector.extract_strided_slice %82 {offsets = [0, 256], sizes = [2, 32], strides = [1, 1]} : vector<2x384xf32> to vector<2x32xf32>
    %95 = arith.mulf %91, %94 : vector<2x32xf32>
    %96 = arith.addf %93, %95 : vector<2x32xf32>
    %97 = math.tanh %96 : vector<2x32xf32>
    %cst_26 = arith.constant 1.000000e+00 : f32
    %98 = vector.broadcast %cst_26 : f32 to vector<2x32xf32>
    %99 = arith.subf %98, %92 : vector<2x32xf32>
    %100 = arith.mulf %99, %97 : vector<2x32xf32>
    %101 = arith.mulf %92, %57 : vector<2x32xf32>
    %102 = arith.addf %100, %101 : vector<2x32xf32>
    %103 = tpu.concatenate %57, %79 in 1 : vector<2x32xf32>, vector<2x32xf32> -> vector<2x64xf32>
    %cst_27 = arith.constant dense<0.000000e+00> : vector<2x512xf32>
    %104 = tpu.matmul %103, %8, %cst_27 {dimension_numbers = #tpu.dot_dimension_numbers<[1], [0], [0], [1], [0, 0, 1, 1], [], []>} : vector<2x64xf32>, vector<64x512xf32>, vector<2x512xf32> -> vector<2x512xf32>
    %105 = vector.broadcast %9 : vector<1x512xf32> to vector<2x512xf32>
    %106 = arith.addf %104, %105 : vector<2x512xf32>
    %107 = vector.extract_strided_slice %106 {offsets = [0, 0], sizes = [2, 256], strides = [1, 1]} : vector<2x512xf32> to vector<2x256xf32>
    %108 = arith.negf %107 : vector<2x256xf32>
    %109 = math.exp %108 : vector<2x256xf32>
    %cst_28 = arith.constant 1.000000e+00 : f32
    %110 = vector.broadcast %cst_28 : f32 to vector<2x256xf32>
    %111 = arith.addf %110, %109 : vector<2x256xf32>
    %112 = arith.divf %110, %111 : vector<2x256xf32>
    %113 = vector.extract_strided_slice %112 {offsets = [0, 0], sizes = [2, 32], strides = [1, 1]} : vector<2x256xf32> to vector<2x32xf32>
    %114 = vector.extract_strided_slice %112 {offsets = [0, 128], sizes = [2, 32], strides = [1, 1]} : vector<2x256xf32> to vector<2x32xf32>
    %115 = vector.extract_strided_slice %106 {offsets = [0, 256], sizes = [2, 32], strides = [1, 1]} : vector<2x512xf32> to vector<2x32xf32>
    %116 = vector.extract_strided_slice %106 {offsets = [0, 384], sizes = [2, 32], strides = [1, 1]} : vector<2x512xf32> to vector<2x32xf32>
    %117 = arith.mulf %113, %116 : vector<2x32xf32>
    %118 = arith.addf %115, %117 : vector<2x32xf32>
    %119 = math.tanh %118 : vector<2x32xf32>
    %cst_29 = arith.constant 1.000000e+00 : f32
    %120 = vector.broadcast %cst_29 : f32 to vector<2x32xf32>
    %121 = arith.subf %120, %114 : vector<2x32xf32>
    %122 = arith.mulf %121, %119 : vector<2x32xf32>
    %123 = arith.mulf %114, %79 : vector<2x32xf32>
    %124 = arith.addf %122, %123 : vector<2x32xf32>
    %cst_30 = arith.constant dense<0.000000e+00> : vector<2x384xf32>
    %125 = tpu.matmul %102, %6, %cst_30 {dimension_numbers = #tpu.dot_dimension_numbers<[1], [0], [0], [1], [0, 0, 1, 1], [], []>} : vector<2x32xf32>, vector<32x384xf32>, vector<2x384xf32> -> vector<2x384xf32>
    %126 = vector.broadcast %7 : vector<1x384xf32> to vector<2x384xf32>
    %127 = arith.addf %125, %126 : vector<2x384xf32>
    %128 = vector.extract_strided_slice %5 {offsets = [6, 0], sizes = [2, 256], strides = [1, 1]} : vector<16x384xf32> to vector<2x256xf32>
    %129 = vector.extract_strided_slice %127 {offsets = [0, 0], sizes = [2, 256], strides = [1, 1]} : vector<2x384xf32> to vector<2x256xf32>
    %130 = arith.addf %128, %129 : vector<2x256xf32>
    %131 = arith.negf %130 : vector<2x256xf32>
    %132 = math.exp %131 : vector<2x256xf32>
    %cst_31 = arith.constant 1.000000e+00 : f32
    %133 = vector.broadcast %cst_31 : f32 to vector<2x256xf32>
    %134 = arith.addf %133, %132 : vector<2x256xf32>
    %135 = arith.divf %133, %134 : vector<2x256xf32>
    %136 = vector.extract_strided_slice %135 {offsets = [0, 0], sizes = [2, 32], strides = [1, 1]} : vector<2x256xf32> to vector<2x32xf32>
    %137 = vector.extract_strided_slice %135 {offsets = [0, 128], sizes = [2, 32], strides = [1, 1]} : vector<2x256xf32> to vector<2x32xf32>
    %138 = vector.extract_strided_slice %5 {offsets = [6, 256], sizes = [2, 32], strides = [1, 1]} : vector<16x384xf32> to vector<2x32xf32>
    %139 = vector.extract_strided_slice %127 {offsets = [0, 256], sizes = [2, 32], strides = [1, 1]} : vector<2x384xf32> to vector<2x32xf32>
    %140 = arith.mulf %136, %139 : vector<2x32xf32>
    %141 = arith.addf %138, %140 : vector<2x32xf32>
    %142 = math.tanh %141 : vector<2x32xf32>
    %cst_32 = arith.constant 1.000000e+00 : f32
    %143 = vector.broadcast %cst_32 : f32 to vector<2x32xf32>
    %144 = arith.subf %143, %137 : vector<2x32xf32>
    %145 = arith.mulf %144, %142 : vector<2x32xf32>
    %146 = arith.mulf %137, %102 : vector<2x32xf32>
    %147 = arith.addf %145, %146 : vector<2x32xf32>
    %148 = tpu.concatenate %102, %124 in 1 : vector<2x32xf32>, vector<2x32xf32> -> vector<2x64xf32>
    %cst_33 = arith.constant dense<0.000000e+00> : vector<2x512xf32>
    %149 = tpu.matmul %148, %8, %cst_33 {dimension_numbers = #tpu.dot_dimension_numbers<[1], [0], [0], [1], [0, 0, 1, 1], [], []>} : vector<2x64xf32>, vector<64x512xf32>, vector<2x512xf32> -> vector<2x512xf32>
    %150 = vector.broadcast %9 : vector<1x512xf32> to vector<2x512xf32>
    %151 = arith.addf %149, %150 : vector<2x512xf32>
    %152 = vector.extract_strided_slice %151 {offsets = [0, 0], sizes = [2, 256], strides = [1, 1]} : vector<2x512xf32> to vector<2x256xf32>
    %153 = arith.negf %152 : vector<2x256xf32>
    %154 = math.exp %153 : vector<2x256xf32>
    %cst_34 = arith.constant 1.000000e+00 : f32
    %155 = vector.broadcast %cst_34 : f32 to vector<2x256xf32>
    %156 = arith.addf %155, %154 : vector<2x256xf32>
    %157 = arith.divf %155, %156 : vector<2x256xf32>
    %158 = vector.extract_strided_slice %157 {offsets = [0, 0], sizes = [2, 32], strides = [1, 1]} : vector<2x256xf32> to vector<2x32xf32>
    %159 = vector.extract_strided_slice %157 {offsets = [0, 128], sizes = [2, 32], strides = [1, 1]} : vector<2x256xf32> to vector<2x32xf32>
    %160 = vector.extract_strided_slice %151 {offsets = [0, 256], sizes = [2, 32], strides = [1, 1]} : vector<2x512xf32> to vector<2x32xf32>
    %161 = vector.extract_strided_slice %151 {offsets = [0, 384], sizes = [2, 32], strides = [1, 1]} : vector<2x512xf32> to vector<2x32xf32>
    %162 = arith.mulf %158, %161 : vector<2x32xf32>
    %163 = arith.addf %160, %162 : vector<2x32xf32>
    %164 = math.tanh %163 : vector<2x32xf32>
    %cst_35 = arith.constant 1.000000e+00 : f32
    %165 = vector.broadcast %cst_35 : f32 to vector<2x32xf32>
    %166 = arith.subf %165, %159 : vector<2x32xf32>
    %167 = arith.mulf %166, %164 : vector<2x32xf32>
    %168 = arith.mulf %159, %124 : vector<2x32xf32>
    %169 = arith.addf %167, %168 : vector<2x32xf32>
    %cst_36 = arith.constant dense<0.000000e+00> : vector<2x384xf32>
    %170 = tpu.matmul %147, %6, %cst_36 {dimension_numbers = #tpu.dot_dimension_numbers<[1], [0], [0], [1], [0, 0, 1, 1], [], []>} : vector<2x32xf32>, vector<32x384xf32>, vector<2x384xf32> -> vector<2x384xf32>
    %171 = vector.broadcast %7 : vector<1x384xf32> to vector<2x384xf32>
    %172 = arith.addf %170, %171 : vector<2x384xf32>
    %173 = vector.extract_strided_slice %5 {offsets = [8, 0], sizes = [2, 256], strides = [1, 1]} : vector<16x384xf32> to vector<2x256xf32>
    %174 = vector.extract_strided_slice %172 {offsets = [0, 0], sizes = [2, 256], strides = [1, 1]} : vector<2x384xf32> to vector<2x256xf32>
    %175 = arith.addf %173, %174 : vector<2x256xf32>
    %176 = arith.negf %175 : vector<2x256xf32>
    %177 = math.exp %176 : vector<2x256xf32>
    %cst_37 = arith.constant 1.000000e+00 : f32
    %178 = vector.broadcast %cst_37 : f32 to vector<2x256xf32>
    %179 = arith.addf %178, %177 : vector<2x256xf32>
    %180 = arith.divf %178, %179 : vector<2x256xf32>
    %181 = vector.extract_strided_slice %180 {offsets = [0, 0], sizes = [2, 32], strides = [1, 1]} : vector<2x256xf32> to vector<2x32xf32>
    %182 = vector.extract_strided_slice %180 {offsets = [0, 128], sizes = [2, 32], strides = [1, 1]} : vector<2x256xf32> to vector<2x32xf32>
    %183 = vector.extract_strided_slice %5 {offsets = [8, 256], sizes = [2, 32], strides = [1, 1]} : vector<16x384xf32> to vector<2x32xf32>
    %184 = vector.extract_strided_slice %172 {offsets = [0, 256], sizes = [2, 32], strides = [1, 1]} : vector<2x384xf32> to vector<2x32xf32>
    %185 = arith.mulf %181, %184 : vector<2x32xf32>
    %186 = arith.addf %183, %185 : vector<2x32xf32>
    %187 = math.tanh %186 : vector<2x32xf32>
    %cst_38 = arith.constant 1.000000e+00 : f32
    %188 = vector.broadcast %cst_38 : f32 to vector<2x32xf32>
    %189 = arith.subf %188, %182 : vector<2x32xf32>
    %190 = arith.mulf %189, %187 : vector<2x32xf32>
    %191 = arith.mulf %182, %147 : vector<2x32xf32>
    %192 = arith.addf %190, %191 : vector<2x32xf32>
    %193 = tpu.concatenate %147, %169 in 1 : vector<2x32xf32>, vector<2x32xf32> -> vector<2x64xf32>
    %cst_39 = arith.constant dense<0.000000e+00> : vector<2x512xf32>
    %194 = tpu.matmul %193, %8, %cst_39 {dimension_numbers = #tpu.dot_dimension_numbers<[1], [0], [0], [1], [0, 0, 1, 1], [], []>} : vector<2x64xf32>, vector<64x512xf32>, vector<2x512xf32> -> vector<2x512xf32>
    %195 = vector.broadcast %9 : vector<1x512xf32> to vector<2x512xf32>
    %196 = arith.addf %194, %195 : vector<2x512xf32>
    %197 = vector.extract_strided_slice %196 {offsets = [0, 0], sizes = [2, 256], strides = [1, 1]} : vector<2x512xf32> to vector<2x256xf32>
    %198 = arith.negf %197 : vector<2x256xf32>
    %199 = math.exp %198 : vector<2x256xf32>
    %cst_40 = arith.constant 1.000000e+00 : f32
    %200 = vector.broadcast %cst_40 : f32 to vector<2x256xf32>
    %201 = arith.addf %200, %199 : vector<2x256xf32>
    %202 = arith.divf %200, %201 : vector<2x256xf32>
    %203 = vector.extract_strided_slice %202 {offsets = [0, 0], sizes = [2, 32], strides = [1, 1]} : vector<2x256xf32> to vector<2x32xf32>
    %204 = vector.extract_strided_slice %202 {offsets = [0, 128], sizes = [2, 32], strides = [1, 1]} : vector<2x256xf32> to vector<2x32xf32>
    %205 = vector.extract_strided_slice %196 {offsets = [0, 256], sizes = [2, 32], strides = [1, 1]} : vector<2x512xf32> to vector<2x32xf32>
    %206 = vector.extract_strided_slice %196 {offsets = [0, 384], sizes = [2, 32], strides = [1, 1]} : vector<2x512xf32> to vector<2x32xf32>
    %207 = arith.mulf %203, %206 : vector<2x32xf32>
    %208 = arith.addf %205, %207 : vector<2x32xf32>
    %209 = math.tanh %208 : vector<2x32xf32>
    %cst_41 = arith.constant 1.000000e+00 : f32
    %210 = vector.broadcast %cst_41 : f32 to vector<2x32xf32>
    %211 = arith.subf %210, %204 : vector<2x32xf32>
    %212 = arith.mulf %211, %209 : vector<2x32xf32>
    %213 = arith.mulf %204, %169 : vector<2x32xf32>
    %214 = arith.addf %212, %213 : vector<2x32xf32>
    %cst_42 = arith.constant dense<0.000000e+00> : vector<2x384xf32>
    %215 = tpu.matmul %192, %6, %cst_42 {dimension_numbers = #tpu.dot_dimension_numbers<[1], [0], [0], [1], [0, 0, 1, 1], [], []>} : vector<2x32xf32>, vector<32x384xf32>, vector<2x384xf32> -> vector<2x384xf32>
    %216 = vector.broadcast %7 : vector<1x384xf32> to vector<2x384xf32>
    %217 = arith.addf %215, %216 : vector<2x384xf32>
    %218 = vector.extract_strided_slice %5 {offsets = [10, 0], sizes = [2, 256], strides = [1, 1]} : vector<16x384xf32> to vector<2x256xf32>
    %219 = vector.extract_strided_slice %217 {offsets = [0, 0], sizes = [2, 256], strides = [1, 1]} : vector<2x384xf32> to vector<2x256xf32>
    %220 = arith.addf %218, %219 : vector<2x256xf32>
    %221 = arith.negf %220 : vector<2x256xf32>
    %222 = math.exp %221 : vector<2x256xf32>
    %cst_43 = arith.constant 1.000000e+00 : f32
    %223 = vector.broadcast %cst_43 : f32 to vector<2x256xf32>
    %224 = arith.addf %223, %222 : vector<2x256xf32>
    %225 = arith.divf %223, %224 : vector<2x256xf32>
    %226 = vector.extract_strided_slice %225 {offsets = [0, 0], sizes = [2, 32], strides = [1, 1]} : vector<2x256xf32> to vector<2x32xf32>
    %227 = vector.extract_strided_slice %225 {offsets = [0, 128], sizes = [2, 32], strides = [1, 1]} : vector<2x256xf32> to vector<2x32xf32>
    %228 = vector.extract_strided_slice %5 {offsets = [10, 256], sizes = [2, 32], strides = [1, 1]} : vector<16x384xf32> to vector<2x32xf32>
    %229 = vector.extract_strided_slice %217 {offsets = [0, 256], sizes = [2, 32], strides = [1, 1]} : vector<2x384xf32> to vector<2x32xf32>
    %230 = arith.mulf %226, %229 : vector<2x32xf32>
    %231 = arith.addf %228, %230 : vector<2x32xf32>
    %232 = math.tanh %231 : vector<2x32xf32>
    %cst_44 = arith.constant 1.000000e+00 : f32
    %233 = vector.broadcast %cst_44 : f32 to vector<2x32xf32>
    %234 = arith.subf %233, %227 : vector<2x32xf32>
    %235 = arith.mulf %234, %232 : vector<2x32xf32>
    %236 = arith.mulf %227, %192 : vector<2x32xf32>
    %237 = arith.addf %235, %236 : vector<2x32xf32>
    %238 = tpu.concatenate %192, %214 in 1 : vector<2x32xf32>, vector<2x32xf32> -> vector<2x64xf32>
    %cst_45 = arith.constant dense<0.000000e+00> : vector<2x512xf32>
    %239 = tpu.matmul %238, %8, %cst_45 {dimension_numbers = #tpu.dot_dimension_numbers<[1], [0], [0], [1], [0, 0, 1, 1], [], []>} : vector<2x64xf32>, vector<64x512xf32>, vector<2x512xf32> -> vector<2x512xf32>
    %240 = vector.broadcast %9 : vector<1x512xf32> to vector<2x512xf32>
    %241 = arith.addf %239, %240 : vector<2x512xf32>
    %242 = vector.extract_strided_slice %241 {offsets = [0, 0], sizes = [2, 256], strides = [1, 1]} : vector<2x512xf32> to vector<2x256xf32>
    %243 = arith.negf %242 : vector<2x256xf32>
    %244 = math.exp %243 : vector<2x256xf32>
    %cst_46 = arith.constant 1.000000e+00 : f32
    %245 = vector.broadcast %cst_46 : f32 to vector<2x256xf32>
    %246 = arith.addf %245, %244 : vector<2x256xf32>
    %247 = arith.divf %245, %246 : vector<2x256xf32>
    %248 = vector.extract_strided_slice %247 {offsets = [0, 0], sizes = [2, 32], strides = [1, 1]} : vector<2x256xf32> to vector<2x32xf32>
    %249 = vector.extract_strided_slice %247 {offsets = [0, 128], sizes = [2, 32], strides = [1, 1]} : vector<2x256xf32> to vector<2x32xf32>
    %250 = vector.extract_strided_slice %241 {offsets = [0, 256], sizes = [2, 32], strides = [1, 1]} : vector<2x512xf32> to vector<2x32xf32>
    %251 = vector.extract_strided_slice %241 {offsets = [0, 384], sizes = [2, 32], strides = [1, 1]} : vector<2x512xf32> to vector<2x32xf32>
    %252 = arith.mulf %248, %251 : vector<2x32xf32>
    %253 = arith.addf %250, %252 : vector<2x32xf32>
    %254 = math.tanh %253 : vector<2x32xf32>
    %cst_47 = arith.constant 1.000000e+00 : f32
    %255 = vector.broadcast %cst_47 : f32 to vector<2x32xf32>
    %256 = arith.subf %255, %249 : vector<2x32xf32>
    %257 = arith.mulf %256, %254 : vector<2x32xf32>
    %258 = arith.mulf %249, %214 : vector<2x32xf32>
    %259 = arith.addf %257, %258 : vector<2x32xf32>
    %cst_48 = arith.constant dense<0.000000e+00> : vector<2x384xf32>
    %260 = tpu.matmul %237, %6, %cst_48 {dimension_numbers = #tpu.dot_dimension_numbers<[1], [0], [0], [1], [0, 0, 1, 1], [], []>} : vector<2x32xf32>, vector<32x384xf32>, vector<2x384xf32> -> vector<2x384xf32>
    %261 = vector.broadcast %7 : vector<1x384xf32> to vector<2x384xf32>
    %262 = arith.addf %260, %261 : vector<2x384xf32>
    %263 = vector.extract_strided_slice %5 {offsets = [12, 0], sizes = [2, 256], strides = [1, 1]} : vector<16x384xf32> to vector<2x256xf32>
    %264 = vector.extract_strided_slice %262 {offsets = [0, 0], sizes = [2, 256], strides = [1, 1]} : vector<2x384xf32> to vector<2x256xf32>
    %265 = arith.addf %263, %264 : vector<2x256xf32>
    %266 = arith.negf %265 : vector<2x256xf32>
    %267 = math.exp %266 : vector<2x256xf32>
    %cst_49 = arith.constant 1.000000e+00 : f32
    %268 = vector.broadcast %cst_49 : f32 to vector<2x256xf32>
    %269 = arith.addf %268, %267 : vector<2x256xf32>
    %270 = arith.divf %268, %269 : vector<2x256xf32>
    %271 = vector.extract_strided_slice %270 {offsets = [0, 0], sizes = [2, 32], strides = [1, 1]} : vector<2x256xf32> to vector<2x32xf32>
    %272 = vector.extract_strided_slice %270 {offsets = [0, 128], sizes = [2, 32], strides = [1, 1]} : vector<2x256xf32> to vector<2x32xf32>
    %273 = vector.extract_strided_slice %5 {offsets = [12, 256], sizes = [2, 32], strides = [1, 1]} : vector<16x384xf32> to vector<2x32xf32>
    %274 = vector.extract_strided_slice %262 {offsets = [0, 256], sizes = [2, 32], strides = [1, 1]} : vector<2x384xf32> to vector<2x32xf32>
    %275 = arith.mulf %271, %274 : vector<2x32xf32>
    %276 = arith.addf %273, %275 : vector<2x32xf32>
    %277 = math.tanh %276 : vector<2x32xf32>
    %cst_50 = arith.constant 1.000000e+00 : f32
    %278 = vector.broadcast %cst_50 : f32 to vector<2x32xf32>
    %279 = arith.subf %278, %272 : vector<2x32xf32>
    %280 = arith.mulf %279, %277 : vector<2x32xf32>
    %281 = arith.mulf %272, %237 : vector<2x32xf32>
    %282 = arith.addf %280, %281 : vector<2x32xf32>
    %283 = tpu.concatenate %237, %259 in 1 : vector<2x32xf32>, vector<2x32xf32> -> vector<2x64xf32>
    %cst_51 = arith.constant dense<0.000000e+00> : vector<2x512xf32>
    %284 = tpu.matmul %283, %8, %cst_51 {dimension_numbers = #tpu.dot_dimension_numbers<[1], [0], [0], [1], [0, 0, 1, 1], [], []>} : vector<2x64xf32>, vector<64x512xf32>, vector<2x512xf32> -> vector<2x512xf32>
    %285 = vector.broadcast %9 : vector<1x512xf32> to vector<2x512xf32>
    %286 = arith.addf %284, %285 : vector<2x512xf32>
    %287 = vector.extract_strided_slice %286 {offsets = [0, 0], sizes = [2, 256], strides = [1, 1]} : vector<2x512xf32> to vector<2x256xf32>
    %288 = arith.negf %287 : vector<2x256xf32>
    %289 = math.exp %288 : vector<2x256xf32>
    %cst_52 = arith.constant 1.000000e+00 : f32
    %290 = vector.broadcast %cst_52 : f32 to vector<2x256xf32>
    %291 = arith.addf %290, %289 : vector<2x256xf32>
    %292 = arith.divf %290, %291 : vector<2x256xf32>
    %293 = vector.extract_strided_slice %292 {offsets = [0, 0], sizes = [2, 32], strides = [1, 1]} : vector<2x256xf32> to vector<2x32xf32>
    %294 = vector.extract_strided_slice %292 {offsets = [0, 128], sizes = [2, 32], strides = [1, 1]} : vector<2x256xf32> to vector<2x32xf32>
    %295 = vector.extract_strided_slice %286 {offsets = [0, 256], sizes = [2, 32], strides = [1, 1]} : vector<2x512xf32> to vector<2x32xf32>
    %296 = vector.extract_strided_slice %286 {offsets = [0, 384], sizes = [2, 32], strides = [1, 1]} : vector<2x512xf32> to vector<2x32xf32>
    %297 = arith.mulf %293, %296 : vector<2x32xf32>
    %298 = arith.addf %295, %297 : vector<2x32xf32>
    %299 = math.tanh %298 : vector<2x32xf32>
    %cst_53 = arith.constant 1.000000e+00 : f32
    %300 = vector.broadcast %cst_53 : f32 to vector<2x32xf32>
    %301 = arith.subf %300, %294 : vector<2x32xf32>
    %302 = arith.mulf %301, %299 : vector<2x32xf32>
    %303 = arith.mulf %294, %259 : vector<2x32xf32>
    %304 = arith.addf %302, %303 : vector<2x32xf32>
    %cst_54 = arith.constant dense<0.000000e+00> : vector<2x384xf32>
    %305 = tpu.matmul %282, %6, %cst_54 {dimension_numbers = #tpu.dot_dimension_numbers<[1], [0], [0], [1], [0, 0, 1, 1], [], []>} : vector<2x32xf32>, vector<32x384xf32>, vector<2x384xf32> -> vector<2x384xf32>
    %306 = vector.broadcast %7 : vector<1x384xf32> to vector<2x384xf32>
    %307 = arith.addf %305, %306 : vector<2x384xf32>
    %308 = vector.extract_strided_slice %5 {offsets = [14, 0], sizes = [2, 256], strides = [1, 1]} : vector<16x384xf32> to vector<2x256xf32>
    %309 = vector.extract_strided_slice %307 {offsets = [0, 0], sizes = [2, 256], strides = [1, 1]} : vector<2x384xf32> to vector<2x256xf32>
    %310 = arith.addf %308, %309 : vector<2x256xf32>
    %311 = arith.negf %310 : vector<2x256xf32>
    %312 = math.exp %311 : vector<2x256xf32>
    %cst_55 = arith.constant 1.000000e+00 : f32
    %313 = vector.broadcast %cst_55 : f32 to vector<2x256xf32>
    %314 = arith.addf %313, %312 : vector<2x256xf32>
    %315 = arith.divf %313, %314 : vector<2x256xf32>
    %316 = vector.extract_strided_slice %315 {offsets = [0, 0], sizes = [2, 32], strides = [1, 1]} : vector<2x256xf32> to vector<2x32xf32>
    %317 = vector.extract_strided_slice %315 {offsets = [0, 128], sizes = [2, 32], strides = [1, 1]} : vector<2x256xf32> to vector<2x32xf32>
    %318 = vector.extract_strided_slice %5 {offsets = [14, 256], sizes = [2, 32], strides = [1, 1]} : vector<16x384xf32> to vector<2x32xf32>
    %319 = vector.extract_strided_slice %307 {offsets = [0, 256], sizes = [2, 32], strides = [1, 1]} : vector<2x384xf32> to vector<2x32xf32>
    %320 = arith.mulf %316, %319 : vector<2x32xf32>
    %321 = arith.addf %318, %320 : vector<2x32xf32>
    %322 = math.tanh %321 : vector<2x32xf32>
    %cst_56 = arith.constant 1.000000e+00 : f32
    %323 = vector.broadcast %cst_56 : f32 to vector<2x32xf32>
    %324 = arith.subf %323, %317 : vector<2x32xf32>
    %325 = arith.mulf %324, %322 : vector<2x32xf32>
    %326 = arith.mulf %317, %282 : vector<2x32xf32>
    %327 = arith.addf %325, %326 : vector<2x32xf32>
    %328 = tpu.concatenate %282, %304 in 1 : vector<2x32xf32>, vector<2x32xf32> -> vector<2x64xf32>
    %cst_57 = arith.constant dense<0.000000e+00> : vector<2x512xf32>
    %329 = tpu.matmul %328, %8, %cst_57 {dimension_numbers = #tpu.dot_dimension_numbers<[1], [0], [0], [1], [0, 0, 1, 1], [], []>} : vector<2x64xf32>, vector<64x512xf32>, vector<2x512xf32> -> vector<2x512xf32>
    %330 = vector.broadcast %9 : vector<1x512xf32> to vector<2x512xf32>
    %331 = arith.addf %329, %330 : vector<2x512xf32>
    %332 = vector.extract_strided_slice %331 {offsets = [0, 0], sizes = [2, 256], strides = [1, 1]} : vector<2x512xf32> to vector<2x256xf32>
    %333 = arith.negf %332 : vector<2x256xf32>
    %334 = math.exp %333 : vector<2x256xf32>
    %cst_58 = arith.constant 1.000000e+00 : f32
    %335 = vector.broadcast %cst_58 : f32 to vector<2x256xf32>
    %336 = arith.addf %335, %334 : vector<2x256xf32>
    %337 = arith.divf %335, %336 : vector<2x256xf32>
    %338 = vector.extract_strided_slice %337 {offsets = [0, 0], sizes = [2, 32], strides = [1, 1]} : vector<2x256xf32> to vector<2x32xf32>
    %339 = vector.extract_strided_slice %337 {offsets = [0, 128], sizes = [2, 32], strides = [1, 1]} : vector<2x256xf32> to vector<2x32xf32>
    %340 = vector.extract_strided_slice %331 {offsets = [0, 256], sizes = [2, 32], strides = [1, 1]} : vector<2x512xf32> to vector<2x32xf32>
    %341 = vector.extract_strided_slice %331 {offsets = [0, 384], sizes = [2, 32], strides = [1, 1]} : vector<2x512xf32> to vector<2x32xf32>
    %342 = arith.mulf %338, %341 : vector<2x32xf32>
    %343 = arith.addf %340, %342 : vector<2x32xf32>
    %344 = math.tanh %343 : vector<2x32xf32>
    %cst_59 = arith.constant 1.000000e+00 : f32
    %345 = vector.broadcast %cst_59 : f32 to vector<2x32xf32>
    %346 = arith.subf %345, %339 : vector<2x32xf32>
    %347 = arith.mulf %346, %344 : vector<2x32xf32>
    %348 = arith.mulf %339, %304 : vector<2x32xf32>
    %349 = arith.addf %347, %348 : vector<2x32xf32>
    %350 = tpu.concatenate %327, %349 in 1 : vector<2x32xf32>, vector<2x32xf32> -> vector<2x64xf32>
    %cst_60 = arith.constant dense<0.000000e+00> : vector<2x512xf32>
    %351 = tpu.matmul %350, %8, %cst_60 {dimension_numbers = #tpu.dot_dimension_numbers<[1], [0], [0], [1], [0, 0, 1, 1], [], []>} : vector<2x64xf32>, vector<64x512xf32>, vector<2x512xf32> -> vector<2x512xf32>
    %352 = vector.broadcast %9 : vector<1x512xf32> to vector<2x512xf32>
    %353 = arith.addf %351, %352 : vector<2x512xf32>
    %354 = vector.extract_strided_slice %353 {offsets = [0, 0], sizes = [2, 256], strides = [1, 1]} : vector<2x512xf32> to vector<2x256xf32>
    %355 = arith.negf %354 : vector<2x256xf32>
    %356 = math.exp %355 : vector<2x256xf32>
    %cst_61 = arith.constant 1.000000e+00 : f32
    %357 = vector.broadcast %cst_61 : f32 to vector<2x256xf32>
    %358 = arith.addf %357, %356 : vector<2x256xf32>
    %359 = arith.divf %357, %358 : vector<2x256xf32>
    %360 = vector.extract_strided_slice %359 {offsets = [0, 0], sizes = [2, 32], strides = [1, 1]} : vector<2x256xf32> to vector<2x32xf32>
    %361 = vector.extract_strided_slice %359 {offsets = [0, 128], sizes = [2, 32], strides = [1, 1]} : vector<2x256xf32> to vector<2x32xf32>
    %362 = vector.extract_strided_slice %353 {offsets = [0, 256], sizes = [2, 32], strides = [1, 1]} : vector<2x512xf32> to vector<2x32xf32>
    %363 = vector.extract_strided_slice %353 {offsets = [0, 384], sizes = [2, 32], strides = [1, 1]} : vector<2x512xf32> to vector<2x32xf32>
    %364 = arith.mulf %360, %363 : vector<2x32xf32>
    %365 = arith.addf %362, %364 : vector<2x32xf32>
    %366 = math.tanh %365 : vector<2x32xf32>
    %cst_62 = arith.constant 1.000000e+00 : f32
    %367 = vector.broadcast %cst_62 : f32 to vector<2x32xf32>
    %368 = arith.subf %367, %361 : vector<2x32xf32>
    %369 = arith.mulf %368, %366 : vector<2x32xf32>
    %370 = arith.mulf %361, %349 : vector<2x32xf32>
    %371 = arith.addf %369, %370 : vector<2x32xf32>
    %372 = tpu.concatenate %259, %304, %349, %371 in 0 : vector<2x32xf32>, vector<2x32xf32>, vector<2x32xf32>, vector<2x32xf32> -> vector<8x32xf32>
    %c0_63 = arith.constant 0 : index
    %c0_64 = arith.constant 0 : index
    %373 = vector.load %arg7[%c0_63, %c0_64] : memref<32x128xf32, #tpu.memory_space<vmem>>, vector<32x128xf32>
    %cst_65 = arith.constant dense<0.000000e+00> : vector<8x128xf32>
    %374 = tpu.matmul %372, %373, %cst_65 {dimension_numbers = #tpu.dot_dimension_numbers<[1], [0], [0], [1], [0, 0, 1, 1], [], []>} : vector<8x32xf32>, vector<32x128xf32>, vector<8x128xf32> -> vector<8x128xf32>
    %c0_66 = arith.constant 0 : index
    %c0_67 = arith.constant 0 : index
    %375 = vector.load %arg8[%c0_66, %c0_67] : memref<1x128xf32, #tpu.memory_space<vmem>>, vector<1x128xf32>
    %376 = vector.broadcast %375 : vector<1x128xf32> to vector<8x128xf32>
    %377 = arith.addf %374, %376 : vector<8x128xf32>
    %c0_68 = arith.constant 0 : index
    %c0_69 = arith.constant 0 : index
    %378 = vector.load %arg9[%c0_68, %c0_69] : memref<8x128xf32, #tpu.memory_space<vmem>>, vector<8x128xf32>
    tpu.vector_store %arg9[%c0_68, %c0_69], %377 {strides = array<i32>} : memref<8x128xf32, #tpu.memory_space<vmem>>, vector<8x128xf32>,
    return
  }
}

</mosaic_0001>

<llo_original>
// kernel: gru_forward.1
$region0: #{gru_forward.1}
  #allocation0 [shape = 'u32[]', space=smem, size = 0x4, offset = 0x4, fixed_abs, tag = 'smem constant byte address 0x4 - core index']
  #allocation1 [shape = 'u32[72,128]{1,0:T(1,128)}', space=vmem, size = 0x9000, scoped, tag = 'internal scratch']
  %s0 = inlined_call_operand.vmem [shape: f32[16,8], index: 0, kind: input, shape index: {}]
  %s1 = inlined_call_operand.hbm [shape: f32[8,384], index: 1, kind: input, shape index: {}]
  %s2 = inlined_call_operand.vmem [shape: f32[1,384], index: 2, kind: input, shape index: {}]
  %s3 = inlined_call_operand.hbm [shape: f32[32,384], index: 3, kind: input, shape index: {}]
  %s4 = inlined_call_operand.hbm [shape: f32[1,384], index: 4, kind: input, shape index: {}]
  %s5 = inlined_call_operand.hbm [shape: f32[64,512], index: 5, kind: input, shape index: {}]
  %s6 = inlined_call_operand.vmem [shape: f32[1,512], index: 6, kind: input, shape index: {}]
  %s7 = inlined_call_operand.vmem [shape: f32[32,128], index: 7, kind: input, shape index: {}]
  %s8 = inlined_call_operand.vmem [shape: f32[1,128], index: 8, kind: input, shape index: {}]
  %s9 = inlined_call_operand.vmem [shape: f32[8,128], index: 9, kind: output, shape index: {}]
  %s10 = sld [smem:[#allocation0]]
  $region62: #{gru_forward.1} parent=0
    _
  %s12 = ssub.s32 1, %s10
  %s13 = scalar_select 0, %s12, %s10
  $region1: #{gru_forward.1} parent=0
    #allocation2 [shape = 'u8[12288]{0}', space=vmem, size = 0x3000, scoped, tag = 'input window, operand 1, single buffered']
    #allocation3 [shape = 's32[1]{0}', space=sflag, size = 0x4, scoped, tag = 'scoped memory for gru_forward.1']
    #allocation4 [shape = 'u8[49152]{0}', space=vmem, size = 0xc000, scoped, tag = 'input window, operand 3, single buffered']
    #allocation5 [shape = 's32[1]{0}', space=sflag, size = 0x4, scoped, tag = 'scoped memory for gru_forward.1']
    #allocation6 [shape = 'u8[1536]{0}', space=vmem, size = 0x800, scoped, tag = 'input window, operand 4, single buffered']
    #allocation7 [shape = 'u8[131072]{0}', space=vmem, size = 0x20000, scoped, tag = 'input window, operand 5, single buffered']
    #allocation8 [shape = 's32[1]{0}', space=sflag, size = 0x4, scoped, tag = 'scoped memory for gru_forward.1']
    %14 = vsyncpa [#allocation3], 0
    %15 = vsyncpa [#allocation5], 0
    %16 = vsyncpa [#allocation8], 0
    // Predicated region
    $region2: #{gru_forward.1} parent=1 // pred_check
      _
    $region3: #{gru_forward.1} parent=1 // pred_check_branch
      %18 = sbr.rel (0) target = $region5
    $region4: #{gru_forward.1} parent=1 // pred_region
      _
    $region5: #{gru_forward.1} parent=1 // pred_fallthru
      _
    // Predicated region
    $region6: #{gru_forward.1} parent=1 // pred_check
      _
    $region7: #{gru_forward.1} parent=1 // pred_check_branch
      %20 = sbr.rel (0) target = $region9
    $region8: #{gru_forward.1} parent=1 // pred_region
      %22 = vsyncadd [#allocation3], 0
      %s24 = sshll.u32 %s1, 4
      %s25 = int_to_ptr.hbm [resolvable:$true] %s24
      %s26 = sshll.u32 [#allocation2], 4
      %s27 = int_to_ptr.vmem [resolvable:$true] %s26
      %29 = dma.hbm_to_vmem [thread:$0]  %s25, 384, %s27, [#allocation3]
    $region9: #{gru_forward.1} parent=1 // pred_fallthru
      _
    // Predicated region
    $region10: #{gru_forward.1} parent=1 // pred_check
      _
    $region11: #{gru_forward.1} parent=1 // pred_check_branch
      %31 = sbr.rel (0) target = $region13
    $region12: #{gru_forward.1} parent=1 // pred_region
      _
    $region13: #{gru_forward.1} parent=1 // pred_fallthru
      _
    // Predicated region
    $region14: #{gru_forward.1} parent=1 // pred_check
      _
    $region15: #{gru_forward.1} parent=1 // pred_check_branch
      %33 = sbr.rel (0) target = $region17
    $region16: #{gru_forward.1} parent=1 // pred_region
      %35 = vsyncadd [#allocation5], 0
      %s36 = sshll.u32 %s3, 4
      %s37 = int_to_ptr.hbm [resolvable:$true] %s36
      %s38 = sshll.u32 [#allocation4], 4
      %s39 = int_to_ptr.vmem [resolvable:$true] %s38
      %44 = dma.hbm_to_vmem [thread:$0]  %s37, 1536, %s39, [#allocation5], 384, 384, 24
    $region17: #{gru_forward.1} parent=1 // pred_fallthru
      _
    // Predicated region
    $region18: #{gru_forward.1} parent=1 // pred_check
      _
    $region19: #{gru_forward.1} parent=1 // pred_check_branch
      %46 = sbr.rel (0) target = $region21
    $region20: #{gru_forward.1} parent=1 // pred_region
      %48 = vsyncadd [#allocation5], 0
      %s50 = sshll.u32 %s4, 4
      %s51 = int_to_ptr.hbm [resolvable:$true] %s50
      %s52 = sshll.u32 [#allocation6], 4
      %s53 = int_to_ptr.vmem [resolvable:$true] %s52
      %55 = dma.hbm_to_vmem [thread:$0]  %s51, 48, %s53, [#allocation5]
    $region21: #{gru_forward.1} parent=1 // pred_fallthru
      _
    // Predicated region
    $region22: #{gru_forward.1} parent=1 // pred_check
      _
    $region23: #{gru_forward.1} parent=1 // pred_check_branch
      %57 = sbr.rel (0) target = $region25
    $region24: #{gru_forward.1} parent=1 // pred_region
      %59 = vsyncadd [#allocation8], 0
      %s60 = sshll.u32 %s5, 4
      %s61 = int_to_ptr.hbm [resolvable:$true] %s60
      %s62 = sshll.u32 [#allocation7], 4
      %s63 = int_to_ptr.vmem [resolvable:$true] %s62
      %68 = dma.hbm_to_vmem [thread:$0]  %s61, 4096, %s63, [#allocation8], 512, 512, 32
    $region25: #{gru_forward.1} parent=1 // pred_fallthru
      _
    // Predicated region
    $region26: #{gru_forward.1} parent=1 // pred_check
      _
    $region27: #{gru_forward.1} parent=1 // pred_check_branch
      %70 = sbr.rel (0) target = $region29
    $region28: #{gru_forward.1} parent=1 // pred_region
      _
    $region29: #{gru_forward.1} parent=1 // pred_fallthru
      _
    // Predicated region
    $region30: #{gru_forward.1} parent=1 // pred_check
      _
    $region31: #{gru_forward.1} parent=1 // pred_check_branch
      %72 = sbr.rel (0) target = $region33
    $region32: #{gru_forward.1} parent=1 // pred_region
      _
    $region33: #{gru_forward.1} parent=1 // pred_fallthru
      _
    // Predicated region
    $region34: #{gru_forward.1} parent=1 // pred_check
      _
    $region35: #{gru_forward.1} parent=1 // pred_check_branch
      %74 = sbr.rel (0) target = $region37
    $region36: #{gru_forward.1} parent=1 // pred_region
      _
    $region37: #{gru_forward.1} parent=1 // pred_fallthru
      _
    // Predicated region
    $region38: #{gru_forward.1} parent=1 // pred_check
      _
    $region39: #{gru_forward.1} parent=1 // pred_check_branch
      %76 = sbr.rel (0) target = $region41
    $region40: #{gru_forward.1} parent=1 // pred_region
      %78 = dma.done [#allocation3], 384
    $region41: #{gru_forward.1} parent=1 // pred_fallthru
      _
    // Predicated region
    $region42: #{gru_forward.1} parent=1 // pred_check
      _
    $region43: #{gru_forward.1} parent=1 // pred_check_branch
      %80 = sbr.rel (0) target = $region45
    $region44: #{gru_forward.1} parent=1 // pred_region
      %82 = dma.done [#allocation5], 1536
    $region45: #{gru_forward.1} parent=1 // pred_fallthru
      _
    // Predicated region
    $region46: #{gru_forward.1} parent=1 // pred_check
      _
    $region47: #{gru_forward.1} parent=1 // pred_check_branch
      %84 = sbr.rel (0) target = $region49
    $region48: #{gru_forward.1} parent=1 // pred_region
      %86 = dma.done [#allocation5], 48
    $region49: #{gru_forward.1} parent=1 // pred_fallthru
      _
    // Predicated region
    $region50: #{gru_forward.1} parent=1 // pred_check
      _
    $region51: #{gru_forward.1} parent=1 // pred_check_branch
      %88 = sbr.rel (0) target = $region53
    $region52: #{gru_forward.1} parent=1 // pred_region
      %90 = dma.done [#allocation8], 4096
    $region53: #{gru_forward.1} parent=1 // pred_fallthru
      _
    %v91 = vld [vmem:[%s0] sm:$0xff]
    %v92 = vld [vmem:[%s0 + $0x8] sm:$0xff]
    %v93 = vld [vmem:[#allocation2] sm:$0xff]
    %v94 = vld [vmem:[#allocation2 + $0x8] sm:$0xff]
    %v95 = vld [vmem:[#allocation2 + $0x10] sm:$0xff]
    %v96 = vld [vmem:[%s2] sm:$0x7]
    %v98 = vperm.slane %v96, 0
    %v99 = vperm.slane %v96, 1
    %v100 = vperm.slane %v96, 2
    %vm104 = vcmask 64512
    %v106 = vsel %vm104, %v91, 0
    %v109 = vsel %vm104, %v92, 0
    %111 = vmatpush.msra.mxu0 0.0
    %112 = vmatpush.msra.mxu0 0.0
    %113 = vmatpush.msra.mxu0 0.0
    %114 = vmatpush.msra.mxu0 0.0
    %115 = vmatpush.msra.mxu0 0.0
    %116 = vmatpush.msra.mxu0 0.0
    %117 = vmatpush.msra.mxu0 0.0
    %118 = vmatpush.msra.mxu0 0.0
    %119 = vmatpush.msra.mxu0 0.0
    %120 = vmatpush.msra.mxu0 0.0
    %121 = vmatpush.msra.mxu0 0.0
    %122 = vmatpush.msra.mxu0 0.0
    %123 = vmatpush.msra.mxu0 0.0
    %124 = vmatpush.msra.mxu0 0.0
    %125 = vmatpush.msra.mxu0 0.0
    %126 = vmatpush.msra.mxu0 %v93
    %127 = vmatmul.f32.gmra.mxu0 %v106
    %v128 = vpop.f32.mrf.mxu0
    %v129 = vadd.f32 %v98, %v128
    %130 = vmatmul.f32.gmra.mxu0 %v109
    %v131 = vpop.f32.mrf.mxu0
    %v132 = vadd.f32 %v98, %v131
    %133 = vdwg.mxu0
    %134 = vmatpush.msra.mxu0 0.0
    %135 = vmatpush.msra.mxu0 0.0
    %136 = vmatpush.msra.mxu0 0.0
    %137 = vmatpush.msra.mxu0 0.0
    %138 = vmatpush.msra.mxu0 0.0
    %139 = vmatpush.msra.mxu0 0.0
    %140 = vmatpush.msra.mxu0 0.0
    %141 = vmatpush.msra.mxu0 0.0
    %142 = vmatpush.msra.mxu0 0.0
    %143 = vmatpush.msra.mxu0 0.0
    %144 = vmatpush.msra.mxu0 0.0
    %145 = vmatpush.msra.mxu0 0.0
    %146 = vmatpush.msra.mxu0 0.0
    %147 = vmatpush.msra.mxu0 0.0
    %148 = vmatpush.msra.mxu0 0.0
    %149 = vmatpush.msra.mxu0 %v94
    %150 = vmatmul.f32.gmra.mxu0 %v106
    %v151 = vpop.f32.mrf.mxu0
    %v152 = vadd.f32 %v99, %v151
    %153 = vmatmul.f32.gmra.mxu0 %v109
    %v154 = vpop.f32.mrf.mxu0
    %v155 = vadd.f32 %v99, %v154
    %156 = vdwg.mxu0
    %157 = vmatpush.msra.mxu0 0.0
    %158 = vmatpush.msra.mxu0 0.0
    %159 = vmatpush.msra.mxu0 0.0
    %160 = vmatpush.msra.mxu0 0.0
    %161 = vmatpush.msra.mxu0 0.0
    %162 = vmatpush.msra.mxu0 0.0
    %163 = vmatpush.msra.mxu0 0.0
    %164 = vmatpush.msra.mxu0 0.0
    %165 = vmatpush.msra.mxu0 0.0
    %166 = vmatpush.msra.mxu0 0.0
    %167 = vmatpush.msra.mxu0 0.0
    %168 = vmatpush.msra.mxu0 0.0
    %169 = vmatpush.msra.mxu0 0.0
    %170 = vmatpush.msra.mxu0 0.0
    %171 = vmatpush.msra.mxu0 0.0
    %172 = vmatpush.msra.mxu0 %v95
    %173 = vmatmul.f32.gmra.mxu0 %v106
    %v174 = vpop.f32.mrf.mxu0
    %v175 = vadd.f32 %v100, %v174
    %176 = vmatmul.f32.gmra.mxu0 %v109
    %v177 = vpop.f32.mrf.mxu0
    %v178 = vadd.f32 %v100, %v177
    %179 = vdwg.mxu0
    %v180 = vld [vmem:[#allocation4] sm:$0xff]
    %v181 = vld [vmem:[#allocation4 + $0x8] sm:$0xff]
    %v182 = vld [vmem:[#allocation4 + $0x10] sm:$0xff]
    %v183 = vld [vmem:[#allocation4 + $0x18] sm:$0xff]
    %v184 = vld [vmem:[#allocation4 + $0x20] sm:$0xff]
    %v185 = vld [vmem:[#allocation4 + $0x28] sm:$0xff]
    %v186 = vld [vmem:[#allocation4 + $0x30] sm:$0xff]
    %v187 = vld [vmem:[#allocation4 + $0x38] sm:$0xff]
    %v188 = vld [vmem:[#allocation4 + $0x40] sm:$0xff]
    %v189 = vld [vmem:[#allocation4 + $0x48] sm:$0xff]
    %v190 = vld [vmem:[#allocation4 + $0x50] sm:$0xff]
    %v191 = vld [vmem:[#allocation4 + $0x58] sm:$0xff]
    %v192 = vld [vmem:[#allocation6] sm:$0x7]
    %v193 = vld [vmem:[#allocation7] sm:$0xff]
    %v194 = vld [vmem:[#allocation7 + $0x8] sm:$0xff]
    %v195 = vld [vmem:[#allocation7 + $0x10] sm:$0xff]
    %v196 = vld [vmem:[#allocation7 + $0x18] sm:$0xff]
    %v197 = vld [vmem:[#allocation7 + $0x20] sm:$0xff]
    %v198 = vld [vmem:[#allocation7 + $0x28] sm:$0xff]
    %v199 = vld [vmem:[#allocation7 + $0x30] sm:$0xff]
    %v200 = vld [vmem:[#allocation7 + $0x38] sm:$0xff]
    %v201 = vld [vmem:[#allocation7 + $0x40] sm:$0xff]
    %v202 = vld [vmem:[#allocation7 + $0x48] sm:$0xff]
    %v203 = vld [vmem:[#allocation7 + $0x50] sm:$0xff]
    %v204 = vld [vmem:[#allocation7 + $0x58] sm:$0xff]
    %v205 = vld [vmem:[#allocation7 + $0x60] sm:$0xff]
    %v206 = vld [vmem:[#allocation7 + $0x68] sm:$0xff]
    %v207 = vld [vmem:[#allocation7 + $0x70] sm:$0xff]
    %v208 = vld [vmem:[#allocation7 + $0x78] sm:$0xff]
    %v209 = vld [vmem:[#allocation7 + $0x80] sm:$0xff]
    %v210 = vld [vmem:[#allocation7 + $0x88] sm:$0xff]
    %v211 = vld [vmem:[#allocation7 + $0x90] sm:$0xff]
    %v212 = vld [vmem:[#allocation7 + $0x98] sm:$0xff]
    %v213 = vld [vmem:[#allocation7 + $0xa0] sm:$0xff]
    %v214 = vld [vmem:[#allocation7 + $0xa8] sm:$0xff]
    %v215 = vld [vmem:[#allocation7 + $0xb0] sm:$0xff]
    %v216 = vld [vmem:[#allocation7 + $0xb8] sm:$0xff]
    %v217 = vld [vmem:[#allocation7 + $0xc0] sm:$0xff]
    %v218 = vld [vmem:[#allocation7 + $0xc8] sm:$0xff]
    %v219 = vld [vmem:[#allocation7 + $0xd0] sm:$0xff]
    %v220 = vld [vmem:[#allocation7 + $0xd8] sm:$0xff]
    %v221 = vld [vmem:[#allocation7 + $0xe0] sm:$0xff]
    %v222 = vld [vmem:[#allocation7 + $0xe8] sm:$0xff]
    %v223 = vld [vmem:[#allocation7 + $0xf0] sm:$0xff]
    %v224 = vld [vmem:[#allocation7 + $0xf8] sm:$0xff]
    %v225 = vld [vmem:[%s6] sm:$0xf]
    %v227 = vperm.slane %v192, 0
    %v228 = vperm.slane %v192, 1
    %v229 = vperm.slane %v192, 2
    %vm233 = vcmask 261120
    %v235 = vsel %vm233, 0.0, 0
    %237 = vmatpush.msra.mxu0 0.0
    %238 = vmatpush.msra.mxu0 0.0
    %239 = vmatpush.msra.mxu0 0.0
    %240 = vmatpush.msra.mxu0 0.0
    %241 = vmatpush.msra.mxu0 0.0
    %242 = vmatpush.msra.mxu0 0.0
    %243 = vmatpush.msra.mxu0 0.0
    %244 = vmatpush.msra.mxu0 0.0
    %245 = vmatpush.msra.mxu0 0.0
    %246 = vmatpush.msra.mxu0 0.0
    %247 = vmatpush.msra.mxu0 0.0
    %248 = vmatpush.msra.mxu0 0.0
    %249 = vmatpush.msra.mxu0 %v189
    %250 = vmatpush.msra.mxu0 %v186
    %251 = vmatpush.msra.mxu0 %v183
    %252 = vmatpush.msra.mxu0 %v180
    %253 = vmatmul.f32.gmra.mxu0 %v235
    %v254 = vpop.f32.mrf.mxu0
    %v255 = vadd.f32 %v227, %v254
    %256 = vdwg.mxu0
    %257 = vmatpush.msra.mxu0 0.0
    %258 = vmatpush.msra.mxu0 0.0
    %259 = vmatpush.msra.mxu0 0.0
    %260 = vmatpush.msra.mxu0 0.0
    %261 = vmatpush.msra.mxu0 0.0
    %262 = vmatpush.msra.mxu0 0.0
    %263 = vmatpush.msra.mxu0 0.0
    %264 = vmatpush.msra.mxu0 0.0
    %265 = vmatpush.msra.mxu0 0.0
    %266 = vmatpush.msra.mxu0 0.0
    %267 = vmatpush.msra.mxu0 0.0
    %268 = vmatpush.msra.mxu0 0.0
    %269 = vmatpush.msra.mxu0 %v190
    %270 = vmatpush.msra.mxu0 %v187
    %271 = vmatpush.msra.mxu0 %v184
    %272 = vmatpush.msra.mxu0 %v181
    %273 = vmatmul.f32.gmra.mxu0 %v235
    %v274 = vpop.f32.mrf.mxu0
    %v275 = vadd.f32 %v228, %v274
    %276 = vdwg.mxu0
    %277 = vmatpush.msra.mxu0 0.0
    %278 = vmatpush.msra.mxu0 0.0
    %279 = vmatpush.msra.mxu0 0.0
    %280 = vmatpush.msra.mxu0 0.0
    %281 = vmatpush.msra.mxu0 0.0
    %282 = vmatpush.msra.mxu0 0.0
    %283 = vmatpush.msra.mxu0 0.0
    %284 = vmatpush.msra.mxu0 0.0
    %285 = vmatpush.msra.mxu0 0.0
    %286 = vmatpush.msra.mxu0 0.0
    %287 = vmatpush.msra.mxu0 0.0
    %288 = vmatpush.msra.mxu0 0.0
    %289 = vmatpush.msra.mxu0 %v191
    %290 = vmatpush.msra.mxu0 %v188
    %291 = vmatpush.msra.mxu0 %v185
    %292 = vmatpush.msra.mxu0 %v182
    %293 = vmatmul.f32.gmra.mxu0 %v235
    %v294 = vpop.f32.mrf.mxu0
    %v295 = vadd.f32 %v229, %v294
    %296 = vdwg.mxu0
    %v297 = vadd.f32 %v129, %v255
    %v298 = vadd.f32 %v152, %v275
    %v299 = vxor.u32 %v297, 2147483648
    %v300 = vxor.u32 %v298, 2147483648
    %v301 = vmul.f32 %v299, 1.442695
    %v302 = vpow.pop %v301
    %v303 = vmul.f32 %v300, 1.442695
    %v304 = vpow.pop %v303
    %v305 = vadd.f32 %v302, 1.0
    %v306 = vadd.f32 %v304, 1.0
    %v307 = vrcp.pop %v305
    %v308 = vmul.f32 %v305, %v307
    %v309 = vsub.f32 1.0, %v308
    %v310 = vmul.f32 %v307, %v309
    %v311 = vadd.f32 %v307, %v310
    %vm312 = vweird.f32 %v305
    %vm313 = vweird.f32 %v307
    %vm314 = vmor %vm312, %vm313
    %v315 = vsel %vm314, %v307, %v311
    %v316 = vand.u32 2147483647, %v305
    %vm317 = vcmp.eq.f32.partialorder %v316, 8.507059e+37
    %v318 = vand.u32 %v305, 2147483648
    %v319 = vor.u32 1.1754944e-38, %v318
    %v320 = vsel %vm317, %v319, %v315
    %v321 = vmul.f32 1.0, %v320
    %v322 = vrcp.pop %v306
    %v323 = vmul.f32 %v306, %v322
    %v324 = vsub.f32 1.0, %v323
    %v325 = vmul.f32 %v322, %v324
    %v326 = vadd.f32 %v322, %v325
    %vm327 = vweird.f32 %v306
    %vm328 = vweird.f32 %v322
    %vm329 = vmor %vm327, %vm328
    %v330 = vsel %vm329, %v322, %v326
    %v331 = vand.u32 2147483647, %v306
    %vm332 = vcmp.eq.f32.partialorder %v331, 8.507059e+37
    %v333 = vand.u32 %v306, 2147483648
    %v334 = vor.u32 1.1754944e-38, %v333
    %v335 = vsel %vm332, %v334, %v330
    %v336 = vmul.f32 1.0, %v335
    %v337 = vmul.f32 %v321, %v295
    %v338 = vadd.f32 %v175, %v337
    %v339 = vtanh.pop %v338
    %v340 = vsub.f32 1.0, %v336
    %v341 = vmul.f32 %v340, %v339
    %v342 = vmul.f32 %v336, 0.0
    %v343 = vadd.f32 %v341, %v342
    %v345 = vsel %vm233, %v343, 0
    %347 = vmatpush.msra.mxu0 0.0
    %348 = vmatpush.msra.mxu0 0.0
    %349 = vmatpush.msra.mxu0 0.0
    %350 = vmatpush.msra.mxu0 0.0
    %351 = vmatpush.msra.mxu0 0.0
    %352 = vmatpush.msra.mxu0 0.0
    %353 = vmatpush.msra.mxu0 0.0
    %354 = vmatpush.msra.mxu0 0.0
    %355 = vmatpush.msra.mxu0 0.0
    %356 = vmatpush.msra.mxu0 0.0
    %357 = vmatpush.msra.mxu0 0.0
    %358 = vmatpush.msra.mxu0 0.0
    %359 = vmatpush.msra.mxu0 %v189
    %360 = vmatpush.msra.mxu0 %v186
    %361 = vmatpush.msra.mxu0 %v183
    %362 = vmatpush.msra.mxu0 %v180
    %363 = vmatmul.f32.gmra.mxu0 %v345
    %v364 = vpop.f32.mrf.mxu0
    %v365 = vadd.f32 %v227, %v364
    %366 = vdwg.mxu0
    %367 = vmatpush.msra.mxu0 0.0
    %368 = vmatpush.msra.mxu0 0.0
    %369 = vmatpush.msra.mxu0 0.0
    %370 = vmatpush.msra.mxu0 0.0
    %371 = vmatpush.msra.mxu0 0.0
    %372 = vmatpush.msra.mxu0 0.0
    %373 = vmatpush.msra.mxu0 0.0
    %374 = vmatpush.msra.mxu0 0.0
    %375 = vmatpush.msra.mxu0 0.0
    %376 = vmatpush.msra.mxu0 0.0
    %377 = vmatpush.msra.mxu0 0.0
    %378 = vmatpush.msra.mxu0 0.0
    %379 = vmatpush.msra.mxu0 %v190
    %380 = vmatpush.msra.mxu0 %v187
    %381 = vmatpush.msra.mxu0 %v184
    %382 = vmatpush.msra.mxu0 %v181
    %383 = vmatmul.f32.gmra.mxu0 %v345
    %v384 = vpop.f32.mrf.mxu0
    %v385 = vadd.f32 %v228, %v384
    %386 = vdwg.mxu0
    %387 = vmatpush.msra.mxu0 0.0
    %388 = vmatpush.msra.mxu0 0.0
    %389 = vmatpush.msra.mxu0 0.0
    %390 = vmatpush.msra.mxu0 0.0
    %391 = vmatpush.msra.mxu0 0.0
    %392 = vmatpush.msra.mxu0 0.0
    %393 = vmatpush.msra.mxu0 0.0
    %394 = vmatpush.msra.mxu0 0.0
    %395 = vmatpush.msra.mxu0 0.0
    %396 = vmatpush.msra.mxu0 0.0
    %397 = vmatpush.msra.mxu0 0.0
    %398 = vmatpush.msra.mxu0 0.0
    %399 = vmatpush.msra.mxu0 %v191
    %400 = vmatpush.msra.mxu0 %v188
    %401 = vmatpush.msra.mxu0 %v185
    %402 = vmatpush.msra.mxu0 %v182
    %403 = vmatmul.f32.gmra.mxu0 %v345
    %v404 = vpop.f32.mrf.mxu0
    %v405 = vadd.f32 %v229, %v404
    %406 = vdwg.mxu0
    %v409 = vrot.slane %v365, 6
    %v410 = vrot.slane %v385, 6
    %v413 = vadd.f32 %v129, %v409
    %v414 = vadd.f32 %v152, %v410
    %v415 = vxor.u32 %v413, 2147483648
    %v416 = vxor.u32 %v414, 2147483648
    %v417 = vmul.f32 %v415, 1.442695
    %v418 = vpow.pop %v417
    %v419 = vmul.f32 %v416, 1.442695
    %v420 = vpow.pop %v419
    %v421 = vadd.f32 %v418, 1.0
    %v422 = vadd.f32 %v420, 1.0
    %v423 = vrcp.pop %v421
    %v424 = vmul.f32 %v421, %v423
    %v425 = vsub.f32 1.0, %v424
    %v426 = vmul.f32 %v423, %v425
    %v427 = vadd.f32 %v423, %v426
    %vm428 = vweird.f32 %v421
    %vm429 = vweird.f32 %v423
    %vm430 = vmor %vm428, %vm429
    %v431 = vsel %vm430, %v423, %v427
    %v432 = vand.u32 2147483647, %v421
    %vm433 = vcmp.eq.f32.partialorder %v432, 8.507059e+37
    %v434 = vand.u32 %v421, 2147483648
    %v435 = vor.u32 1.1754944e-38, %v434
    %v436 = vsel %vm433, %v435, %v431
    %v437 = vmul.f32 1.0, %v436
    %v438 = vrcp.pop %v422
    %v439 = vmul.f32 %v422, %v438
    %v440 = vsub.f32 1.0, %v439
    %v441 = vmul.f32 %v438, %v440
    %v442 = vadd.f32 %v438, %v441
    %vm443 = vweird.f32 %v422
    %vm444 = vweird.f32 %v438
    %vm445 = vmor %vm443, %vm444
    %v446 = vsel %vm445, %v438, %v442
    %v447 = vand.u32 2147483647, %v422
    %vm448 = vcmp.eq.f32.partialorder %v447, 8.507059e+37
    %v449 = vand.u32 %v422, 2147483648
    %v450 = vor.u32 1.1754944e-38, %v449
    %v451 = vsel %vm448, %v450, %v446
    %v452 = vmul.f32 1.0, %v451
    %v454 = vrot.slane %v405, 6
    %v456 = vmul.f32 %v437, %v454
    %v457 = vadd.f32 %v175, %v456
    %v458 = vtanh.pop %v457
    %v459 = vsub.f32 1.0, %v452
    %v460 = vmul.f32 %v459, %v458
    %v461 = vrot.slane %v343, 6
    %v463 = vmul.f32 %v452, %v461
    %v464 = vadd.f32 %v460, %v463
    %v465 = vsel %vm233, %v343, 0.0
    %v467 = vperm.slane %v225, 0
    %v468 = vperm.slane %v225, 1
    %v469 = vperm.slane %v225, 2
    %v470 = vperm.slane %v225, 3
    %vm475 = vcmask 523264
    %v477 = vsel %vm475, %v465, 0
    %479 = vmatpush.msra.mxu0 0.0
    %480 = vmatpush.msra.mxu0 0.0
    %481 = vmatpush.msra.mxu0 0.0
    %482 = vmatpush.msra.mxu0 0.0
    %483 = vmatpush.msra.mxu0 0.0
    %484 = vmatpush.msra.mxu0 0.0
    %485 = vmatpush.msra.mxu0 0.0
    %486 = vmatpush.msra.mxu0 0.0
    %487 = vmatpush.msra.mxu0 %v221
    %488 = vmatpush.msra.mxu0 %v217
    %489 = vmatpush.msra.mxu0 %v213
    %490 = vmatpush.msra.mxu0 %v209
    %491 = vmatpush.msra.mxu0 %v205
    %492 = vmatpush.msra.mxu0 %v201
    %493 = vmatpush.msra.mxu0 %v197
    %494 = vmatpush.msra.mxu0 %v193
    %495 = vmatmul.f32.gmra.mxu0 %v477
    %v496 = vpop.f32.mrf.mxu0
    %v497 = vadd.f32 %v467, %v496
    %498 = vdwg.mxu0
    %499 = vmatpush.msra.mxu0 0.0
    %500 = vmatpush.msra.mxu0 0.0
    %501 = vmatpush.msra.mxu0 0.0
    %502 = vmatpush.msra.mxu0 0.0
    %503 = vmatpush.msra.mxu0 0.0
    %504 = vmatpush.msra.mxu0 0.0
    %505 = vmatpush.msra.mxu0 0.0
    %506 = vmatpush.msra.mxu0 0.0
    %507 = vmatpush.msra.mxu0 %v222
    %508 = vmatpush.msra.mxu0 %v218
    %509 = vmatpush.msra.mxu0 %v214
    %510 = vmatpush.msra.mxu0 %v210
    %511 = vmatpush.msra.mxu0 %v206
    %512 = vmatpush.msra.mxu0 %v202
    %513 = vmatpush.msra.mxu0 %v198
    %514 = vmatpush.msra.mxu0 %v194
    %515 = vmatmul.f32.gmra.mxu0 %v477
    %v516 = vpop.f32.mrf.mxu0
    %v517 = vadd.f32 %v468, %v516
    %518 = vdwg.mxu0
    %519 = vmatpush.msra.mxu0 0.0
    %520 = vmatpush.msra.mxu0 0.0
    %521 = vmatpush.msra.mxu0 0.0
    %522 = vmatpush.msra.mxu0 0.0
    %523 = vmatpush.msra.mxu0 0.0
    %524 = vmatpush.msra.mxu0 0.0
    %525 = vmatpush.msra.mxu0 0.0
    %526 = vmatpush.msra.mxu0 0.0
    %527 = vmatpush.msra.mxu0 %v223
    %528 = vmatpush.msra.mxu0 %v219
    %529 = vmatpush.msra.mxu0 %v215
    %530 = vmatpush.msra.mxu0 %v211
    %531 = vmatpush.msra.mxu0 %v207
    %532 = vmatpush.msra.mxu0 %v203
    %533 = vmatpush.msra.mxu0 %v199
    %534 = vmatpush.msra.mxu0 %v195
    %535 = vmatmul.f32.gmra.mxu0 %v477
    %v536 = vpop.f32.mrf.mxu0
    %v537 = vadd.f32 %v469, %v536
    %538 = vdwg.mxu0
    %539 = vmatpush.msra.mxu0 0.0
    %540 = vmatpush.msra.mxu0 0.0
    %541 = vmatpush.msra.mxu0 0.0
    %542 = vmatpush.msra.mxu0 0.0
    %543 = vmatpush.msra.mxu0 0.0
    %544 = vmatpush.msra.mxu0 0.0
    %545 = vmatpush.msra.mxu0 0.0
    %546 = vmatpush.msra.mxu0 0.0
    %547 = vmatpush.msra.mxu0 %v224
    %548 = vmatpush.msra.mxu0 %v220
    %549 = vmatpush.msra.mxu0 %v216
    %550 = vmatpush.msra.mxu0 %v212
    %551 = vmatpush.msra.mxu0 %v208
    %552 = vmatpush.msra.mxu0 %v204
    %553 = vmatpush.msra.mxu0 %v200
    %554 = vmatpush.msra.mxu0 %v196
    %555 = vmatmul.f32.gmra.mxu0 %v477
    %v556 = vpop.f32.mrf.mxu0
    %v557 = vadd.f32 %v470, %v556
    %558 = vdwg.mxu0
    %v559 = vxor.u32 %v497, 2147483648
    %v560 = vxor.u32 %v517, 2147483648
    %v561 = vmul.f32 %v559, 1.442695
    %v562 = vpow.pop %v561
    %v563 = vmul.f32 %v560, 1.442695
    %v564 = vpow.pop %v563
    %v565 = vadd.f32 %v562, 1.0
    %v566 = vadd.f32 %v564, 1.0
    %v567 = vrcp.pop %v565
    %v568 = vmul.f32 %v565, %v567
    %v569 = vsub.f32 1.0, %v568
    %v570 = vmul.f32 %v567, %v569
    %v571 = vadd.f32 %v567, %v570
    %vm572 = vweird.f32 %v565
    %vm573 = vweird.f32 %v567
    %vm574 = vmor %vm572, %vm573
    %v575 = vsel %vm574, %v567, %v571
    %v576 = vand.u32 2147483647, %v565
    %vm577 = vcmp.eq.f32.partialorder %v576, 8.507059e+37
    %v578 = vand.u32 %v565, 2147483648
    %v579 = vor.u32 1.1754944e-38, %v578
    %v580 = vsel %vm577, %v579, %v575
    %v581 = vmul.f32 1.0, %v580
    %v582 = vrcp.pop %v566
    %v583 = vmul.f32 %v566, %v582
    %v584 = vsub.f32 1.0, %v583
    %v585 = vmul.f32 %v582, %v584
    %v586 = vadd.f32 %v582, %v585
    %vm587 = vweird.f32 %v566
    %vm588 = vweird.f32 %v582
    %vm589 = vmor %vm587, %vm588
    %v590 = vsel %vm589, %v582, %v586
    %v591 = vand.u32 2147483647, %v566
    %vm592 = vcmp.eq.f32.partialorder %v591, 8.507059e+37
    %v593 = vand.u32 %v566, 2147483648
    %v594 = vor.u32 1.1754944e-38, %v593
    %v595 = vsel %vm592, %v594, %v590
    %v596 = vmul.f32 1.0, %v595
    %v597 = vmul.f32 %v581, %v557
    %v598 = vadd.f32 %v537, %v597
    %v599 = vtanh.pop %v598
    %v600 = vsub.f32 1.0, %v596
    %v601 = vmul.f32 %v600, %v599
    %v602 = vmul.f32 %v596, 0.0
    %v603 = vadd.f32 %v601, %v602
    %v605 = vrot.slane %v464, 2
    %v606 = vsel %vm233, %v605, 0
    %608 = vmatpush.msra.mxu0 0.0
    %609 = vmatpush.msra.mxu0 0.0
    %610 = vmatpush.msra.mxu0 0.0
    %611 = vmatpush.msra.mxu0 0.0
    %612 = vmatpush.msra.mxu0 0.0
    %613 = vmatpush.msra.mxu0 0.0
    %614 = vmatpush.msra.mxu0 0.0
    %615 = vmatpush.msra.mxu0 0.0
    %616 = vmatpush.msra.mxu0 0.0
    %617 = vmatpush.msra.mxu0 0.0
    %618 = vmatpush.msra.mxu0 0.0
    %619 = vmatpush.msra.mxu0 0.0
    %620 = vmatpush.msra.mxu0 %v189
    %621 = vmatpush.msra.mxu0 %v186
    %622 = vmatpush.msra.mxu0 %v183
    %623 = vmatpush.msra.mxu0 %v180
    %624 = vmatmul.f32.gmra.mxu0 %v606
    %v625 = vpop.f32.mrf.mxu0
    %v626 = vadd.f32 %v227, %v625
    %627 = vdwg.mxu0
    %628 = vmatpush.msra.mxu0 0.0
    %629 = vmatpush.msra.mxu0 0.0
    %630 = vmatpush.msra.mxu0 0.0
    %631 = vmatpush.msra.mxu0 0.0
    %632 = vmatpush.msra.mxu0 0.0
    %633 = vmatpush.msra.mxu0 0.0
    %634 = vmatpush.msra.mxu0 0.0
    %635 = vmatpush.msra.mxu0 0.0
    %636 = vmatpush.msra.mxu0 0.0
    %637 = vmatpush.msra.mxu0 0.0
    %638 = vmatpush.msra.mxu0 0.0
    %639 = vmatpush.msra.mxu0 0.0
    %640 = vmatpush.msra.mxu0 %v190
    %641 = vmatpush.msra.mxu0 %v187
    %642 = vmatpush.msra.mxu0 %v184
    %643 = vmatpush.msra.mxu0 %v181
    %644 = vmatmul.f32.gmra.mxu0 %v606
    %v645 = vpop.f32.mrf.mxu0
    %v646 = vadd.f32 %v228, %v645
    %647 = vdwg.mxu0
    %648 = vmatpush.msra.mxu0 0.0
    %649 = vmatpush.msra.mxu0 0.0
    %650 = vmatpush.msra.mxu0 0.0
    %651 = vmatpush.msra.mxu0 0.0
    %652 = vmatpush.msra.mxu0 0.0
    %653 = vmatpush.msra.mxu0 0.0
    %654 = vmatpush.msra.mxu0 0.0
    %655 = vmatpush.msra.mxu0 0.0
    %656 = vmatpush.msra.mxu0 0.0
    %657 = vmatpush.msra.mxu0 0.0
    %658 = vmatpush.msra.mxu0 0.0
    %659 = vmatpush.msra.mxu0 0.0
    %660 = vmatpush.msra.mxu0 %v191
    %661 = vmatpush.msra.mxu0 %v188
    %662 = vmatpush.msra.mxu0 %v185
    %663 = vmatpush.msra.mxu0 %v182
    %664 = vmatmul.f32.gmra.mxu0 %v606
    %v665 = vpop.f32.mrf.mxu0
    %v666 = vadd.f32 %v229, %v665
    %667 = vdwg.mxu0
    %v670 = vrot.slane %v626, 4
    %v671 = vrot.slane %v646, 4
    %v674 = vadd.f32 %v129, %v670
    %v675 = vadd.f32 %v152, %v671
    %v676 = vxor.u32 %v674, 2147483648
    %v677 = vxor.u32 %v675, 2147483648
    %v678 = vmul.f32 %v676, 1.442695
    %v679 = vpow.pop %v678
    %v680 = vmul.f32 %v677, 1.442695
    %v681 = vpow.pop %v680
    %v682 = vadd.f32 %v679, 1.0
    %v683 = vadd.f32 %v681, 1.0
    %v684 = vrcp.pop %v682
    %v685 = vmul.f32 %v682, %v684
    %v686 = vsub.f32 1.0, %v685
    %v687 = vmul.f32 %v684, %v686
    %v688 = vadd.f32 %v684, %v687
    %vm689 = vweird.f32 %v682
    %vm690 = vweird.f32 %v684
    %vm691 = vmor %vm689, %vm690
    %v692 = vsel %vm691, %v684, %v688
    %v693 = vand.u32 2147483647, %v682
    %vm694 = vcmp.eq.f32.partialorder %v693, 8.507059e+37
    %v695 = vand.u32 %v682, 2147483648
    %v696 = vor.u32 1.1754944e-38, %v695
    %v697 = vsel %vm694, %v696, %v692
    %v698 = vmul.f32 1.0, %v697
    %v699 = vrcp.pop %v683
    %v700 = vmul.f32 %v683, %v699
    %v701 = vsub.f32 1.0, %v700
    %v702 = vmul.f32 %v699, %v701
    %v703 = vadd.f32 %v699, %v702
    %vm704 = vweird.f32 %v683
    %vm705 = vweird.f32 %v699
    %vm706 = vmor %vm704, %vm705
    %v707 = vsel %vm706, %v699, %v703
    %v708 = vand.u32 2147483647, %v683
    %vm709 = vcmp.eq.f32.partialorder %v708, 8.507059e+37
    %v710 = vand.u32 %v683, 2147483648
    %v711 = vor.u32 1.1754944e-38, %v710
    %v712 = vsel %vm709, %v711, %v707
    %v713 = vmul.f32 1.0, %v712
    %v715 = vrot.slane %v666, 4
    %v717 = vmul.f32 %v698, %v715
    %v718 = vadd.f32 %v175, %v717
    %v719 = vtanh.pop %v718
    %v720 = vsub.f32 1.0, %v713
    %v721 = vmul.f32 %v720, %v719
    %v722 = vrot.slane %v464, 6
    %v724 = vmul.f32 %v713, %v722
    %v725 = vadd.f32 %v721, %v724
    %v727 = vrot.slane %v603, 6
    %728 = vrot.lane.b32.xlu0 %v727, 32
    %v729 = vpop.permute.xlu0 %728
    %v731 = vsel %vm233, %v464, %v729
    %v733 = vrot.slane %v731, 2
    %v734 = vsel %vm475, %v733, 0
    %736 = vmatpush.msra.mxu0 0.0
    %737 = vmatpush.msra.mxu0 0.0
    %738 = vmatpush.msra.mxu0 0.0
    %739 = vmatpush.msra.mxu0 0.0
    %740 = vmatpush.msra.mxu0 0.0
    %741 = vmatpush.msra.mxu0 0.0
    %742 = vmatpush.msra.mxu0 0.0
    %743 = vmatpush.msra.mxu0 0.0
    %744 = vmatpush.msra.mxu0 %v221
    %745 = vmatpush.msra.mxu0 %v217
    %746 = vmatpush.msra.mxu0 %v213
    %747 = vmatpush.msra.mxu0 %v209
    %748 = vmatpush.msra.mxu0 %v205
    %749 = vmatpush.msra.mxu0 %v201
    %750 = vmatpush.msra.mxu0 %v197
    %751 = vmatpush.msra.mxu0 %v193
    %752 = vmatmul.f32.gmra.mxu0 %v734
    %v753 = vpop.f32.mrf.mxu0
    %v754 = vadd.f32 %v467, %v753
    %755 = vdwg.mxu0
    %756 = vmatpush.msra.mxu0 0.0
    %757 = vmatpush.msra.mxu0 0.0
    %758 = vmatpush.msra.mxu0 0.0
    %759 = vmatpush.msra.mxu0 0.0
    %760 = vmatpush.msra.mxu0 0.0
    %761 = vmatpush.msra.mxu0 0.0
    %762 = vmatpush.msra.mxu0 0.0
    %763 = vmatpush.msra.mxu0 0.0
    %764 = vmatpush.msra.mxu0 %v222
    %765 = vmatpush.msra.mxu0 %v218
    %766 = vmatpush.msra.mxu0 %v214
    %767 = vmatpush.msra.mxu0 %v210
    %768 = vmatpush.msra.mxu0 %v206
    %769 = vmatpush.msra.mxu0 %v202
    %770 = vmatpush.msra.mxu0 %v198
    %771 = vmatpush.msra.mxu0 %v194
    %772 = vmatmul.f32.gmra.mxu0 %v734
    %v773 = vpop.f32.mrf.mxu0
    %v774 = vadd.f32 %v468, %v773
    %775 = vdwg.mxu0
    %776 = vmatpush.msra.mxu0 0.0
    %777 = vmatpush.msra.mxu0 0.0
    %778 = vmatpush.msra.mxu0 0.0
    %779 = vmatpush.msra.mxu0 0.0
    %780 = vmatpush.msra.mxu0 0.0
    %781 = vmatpush.msra.mxu0 0.0
    %782 = vmatpush.msra.mxu0 0.0
    %783 = vmatpush.msra.mxu0 0.0
    %784 = vmatpush.msra.mxu0 %v223
    %785 = vmatpush.msra.mxu0 %v219
    %786 = vmatpush.msra.mxu0 %v215
    %787 = vmatpush.msra.mxu0 %v211
    %788 = vmatpush.msra.mxu0 %v207
    %789 = vmatpush.msra.mxu0 %v203
    %790 = vmatpush.msra.mxu0 %v199
    %791 = vmatpush.msra.mxu0 %v195
    %792 = vmatmul.f32.gmra.mxu0 %v734
    %v793 = vpop.f32.mrf.mxu0
    %v794 = vadd.f32 %v469, %v793
    %795 = vdwg.mxu0
    %796 = vmatpush.msra.mxu0 0.0
    %797 = vmatpush.msra.mxu0 0.0
    %798 = vmatpush.msra.mxu0 0.0
    %799 = vmatpush.msra.mxu0 0.0
    %800 = vmatpush.msra.mxu0 0.0
    %801 = vmatpush.msra.mxu0 0.0
    %802 = vmatpush.msra.mxu0 0.0
    %803 = vmatpush.msra.mxu0 0.0
    %804 = vmatpush.msra.mxu0 %v224
    %805 = vmatpush.msra.mxu0 %v220
    %806 = vmatpush.msra.mxu0 %v216
    %807 = vmatpush.msra.mxu0 %v212
    %808 = vmatpush.msra.mxu0 %v208
    %809 = vmatpush.msra.mxu0 %v204
    %810 = vmatpush.msra.mxu0 %v200
    %811 = vmatpush.msra.mxu0 %v196
    %812 = vmatmul.f32.gmra.mxu0 %v734
    %v813 = vpop.f32.mrf.mxu0
    %v814 = vadd.f32 %v470, %v813
    %815 = vdwg.mxu0
    %v816 = vxor.u32 %v754, 2147483648
    %v817 = vxor.u32 %v774, 2147483648
    %v818 = vmul.f32 %v816, 1.442695
    %v819 = vpow.pop %v818
    %v820 = vmul.f32 %v817, 1.442695
    %v821 = vpow.pop %v820
    %v822 = vadd.f32 %v819, 1.0
    %v823 = vadd.f32 %v821, 1.0
    %v824 = vrcp.pop %v822
    %v825 = vmul.f32 %v822, %v824
    %v826 = vsub.f32 1.0, %v825
    %v827 = vmul.f32 %v824, %v826
    %v828 = vadd.f32 %v824, %v827
    %vm829 = vweird.f32 %v822
    %vm830 = vweird.f32 %v824
    %vm831 = vmor %vm829, %vm830
    %v832 = vsel %vm831, %v824, %v828
    %v833 = vand.u32 2147483647, %v822
    %vm834 = vcmp.eq.f32.partialorder %v833, 8.507059e+37
    %v835 = vand.u32 %v822, 2147483648
    %v836 = vor.u32 1.1754944e-38, %v835
    %v837 = vsel %vm834, %v836, %v832
    %v838 = vmul.f32 1.0, %v837
    %v839 = vrcp.pop %v823
    %v840 = vmul.f32 %v823, %v839
    %v841 = vsub.f32 1.0, %v840
    %v842 = vmul.f32 %v839, %v841
    %v843 = vadd.f32 %v839, %v842
    %vm844 = vweird.f32 %v823
    %vm845 = vweird.f32 %v839
    %vm846 = vmor %vm844, %vm845
    %v847 = vsel %vm846, %v839, %v843
    %v848 = vand.u32 2147483647, %v823
    %vm849 = vcmp.eq.f32.partialorder %v848, 8.507059e+37
    %v850 = vand.u32 %v823, 2147483648
    %v851 = vor.u32 1.1754944e-38, %v850
    %v852 = vsel %vm849, %v851, %v847
    %v853 = vmul.f32 1.0, %v852
    %v854 = vmul.f32 %v838, %v814
    %v855 = vadd.f32 %v794, %v854
    %v856 = vtanh.pop %v855
    %v857 = vsub.f32 1.0, %v853
    %v858 = vmul.f32 %v857, %v856
    %v859 = vmul.f32 %v853, %v603
    %v860 = vadd.f32 %v858, %v859
    %v862 = vrot.slane %v725, 4
    %v863 = vsel %vm233, %v862, 0
    %865 = vmatpush.msra.mxu0 0.0
    %866 = vmatpush.msra.mxu0 0.0
    %867 = vmatpush.msra.mxu0 0.0
    %868 = vmatpush.msra.mxu0 0.0
    %869 = vmatpush.msra.mxu0 0.0
    %870 = vmatpush.msra.mxu0 0.0
    %871 = vmatpush.msra.mxu0 0.0
    %872 = vmatpush.msra.mxu0 0.0
    %873 = vmatpush.msra.mxu0 0.0
    %874 = vmatpush.msra.mxu0 0.0
    %875 = vmatpush.msra.mxu0 0.0
    %876 = vmatpush.msra.mxu0 0.0
    %877 = vmatpush.msra.mxu0 %v189
    %878 = vmatpush.msra.mxu0 %v186
    %879 = vmatpush.msra.mxu0 %v183
    %880 = vmatpush.msra.mxu0 %v180
    %881 = vmatmul.f32.gmra.mxu0 %v863
    %v882 = vpop.f32.mrf.mxu0
    %v883 = vadd.f32 %v227, %v882
    %884 = vdwg.mxu0
    %885 = vmatpush.msra.mxu0 0.0
    %886 = vmatpush.msra.mxu0 0.0
    %887 = vmatpush.msra.mxu0 0.0
    %888 = vmatpush.msra.mxu0 0.0
    %889 = vmatpush.msra.mxu0 0.0
    %890 = vmatpush.msra.mxu0 0.0
    %891 = vmatpush.msra.mxu0 0.0
    %892 = vmatpush.msra.mxu0 0.0
    %893 = vmatpush.msra.mxu0 0.0
    %894 = vmatpush.msra.mxu0 0.0
    %895 = vmatpush.msra.mxu0 0.0
    %896 = vmatpush.msra.mxu0 0.0
    %897 = vmatpush.msra.mxu0 %v190
    %898 = vmatpush.msra.mxu0 %v187
    %899 = vmatpush.msra.mxu0 %v184
    %900 = vmatpush.msra.mxu0 %v181
    %901 = vmatmul.f32.gmra.mxu0 %v863
    %v902 = vpop.f32.mrf.mxu0
    %v903 = vadd.f32 %v228, %v902
    %904 = vdwg.mxu0
    %905 = vmatpush.msra.mxu0 0.0
    %906 = vmatpush.msra.mxu0 0.0
    %907 = vmatpush.msra.mxu0 0.0
    %908 = vmatpush.msra.mxu0 0.0
    %909 = vmatpush.msra.mxu0 0.0
    %910 = vmatpush.msra.mxu0 0.0
    %911 = vmatpush.msra.mxu0 0.0
    %912 = vmatpush.msra.mxu0 0.0
    %913 = vmatpush.msra.mxu0 0.0
    %914 = vmatpush.msra.mxu0 0.0
    %915 = vmatpush.msra.mxu0 0.0
    %916 = vmatpush.msra.mxu0 0.0
    %917 = vmatpush.msra.mxu0 %v191
    %918 = vmatpush.msra.mxu0 %v188
    %919 = vmatpush.msra.mxu0 %v185
    %920 = vmatpush.msra.mxu0 %v182
    %921 = vmatmul.f32.gmra.mxu0 %v863
    %v922 = vpop.f32.mrf.mxu0
    %v923 = vadd.f32 %v229, %v922
    %924 = vdwg.mxu0
    %v927 = vrot.slane %v883, 2
    %v928 = vrot.slane %v903, 2
    %v931 = vadd.f32 %v129, %v927
    %v932 = vadd.f32 %v152, %v928
    %v933 = vxor.u32 %v931, 2147483648
    %v934 = vxor.u32 %v932, 2147483648
    %v935 = vmul.f32 %v933, 1.442695
    %v936 = vpow.pop %v935
    %v937 = vmul.f32 %v934, 1.442695
    %v938 = vpow.pop %v937
    %v939 = vadd.f32 %v936, 1.0
    %v940 = vadd.f32 %v938, 1.0
    %v941 = vrcp.pop %v939
    %v942 = vmul.f32 %v939, %v941
    %v943 = vsub.f32 1.0, %v942
    %v944 = vmul.f32 %v941, %v943
    %v945 = vadd.f32 %v941, %v944
    %vm946 = vweird.f32 %v939
    %vm947 = vweird.f32 %v941
    %vm948 = vmor %vm946, %vm947
    %v949 = vsel %vm948, %v941, %v945
    %v950 = vand.u32 2147483647, %v939
    %vm951 = vcmp.eq.f32.partialorder %v950, 8.507059e+37
    %v952 = vand.u32 %v939, 2147483648
    %v953 = vor.u32 1.1754944e-38, %v952
    %v954 = vsel %vm951, %v953, %v949
    %v955 = vmul.f32 1.0, %v954
    %v956 = vrcp.pop %v940
    %v957 = vmul.f32 %v940, %v956
    %v958 = vsub.f32 1.0, %v957
    %v959 = vmul.f32 %v956, %v958
    %v960 = vadd.f32 %v956, %v959
    %vm961 = vweird.f32 %v940
    %vm962 = vweird.f32 %v956
    %vm963 = vmor %vm961, %vm962
    %v964 = vsel %vm963, %v956, %v960
    %v965 = vand.u32 2147483647, %v940
    %vm966 = vcmp.eq.f32.partialorder %v965, 8.507059e+37
    %v967 = vand.u32 %v940, 2147483648
    %v968 = vor.u32 1.1754944e-38, %v967
    %v969 = vsel %vm966, %v968, %v964
    %v970 = vmul.f32 1.0, %v969
    %v972 = vrot.slane %v923, 2
    %v974 = vmul.f32 %v955, %v972
    %v975 = vadd.f32 %v175, %v974
    %v976 = vtanh.pop %v975
    %v977 = vsub.f32 1.0, %v970
    %v978 = vmul.f32 %v977, %v976
    %v979 = vrot.slane %v725, 6
    %v981 = vmul.f32 %v970, %v979
    %v982 = vadd.f32 %v978, %v981
    %v984 = vrot.slane %v860, 4
    %985 = vrot.lane.b32.xlu0 %v984, 32
    %v986 = vpop.permute.xlu0 %985
    %v988 = vsel %vm233, %v725, %v986
    %v990 = vrot.slane %v988, 4
    %v991 = vsel %vm475, %v990, 0
    %993 = vmatpush.msra.mxu0 0.0
    %994 = vmatpush.msra.mxu0 0.0
    %995 = vmatpush.msra.mxu0 0.0
    %996 = vmatpush.msra.mxu0 0.0
    %997 = vmatpush.msra.mxu0 0.0
    %998 = vmatpush.msra.mxu0 0.0
    %999 = vmatpush.msra.mxu0 0.0
    %1000 = vmatpush.msra.mxu0 0.0
    %1001 = vmatpush.msra.mxu0 %v221
    %1002 = vmatpush.msra.mxu0 %v217
    %1003 = vmatpush.msra.mxu0 %v213
    %1004 = vmatpush.msra.mxu0 %v209
    %1005 = vmatpush.msra.mxu0 %v205
    %1006 = vmatpush.msra.mxu0 %v201
    %1007 = vmatpush.msra.mxu0 %v197
    %1008 = vmatpush.msra.mxu0 %v193
    %1009 = vmatmul.f32.gmra.mxu0 %v991
    %v1010 = vpop.f32.mrf.mxu0
    %v1011 = vadd.f32 %v467, %v1010
    %1012 = vdwg.mxu0
    %1013 = vmatpush.msra.mxu0 0.0
    %1014 = vmatpush.msra.mxu0 0.0
    %1015 = vmatpush.msra.mxu0 0.0
    %1016 = vmatpush.msra.mxu0 0.0
    %1017 = vmatpush.msra.mxu0 0.0
    %1018 = vmatpush.msra.mxu0 0.0
    %1019 = vmatpush.msra.mxu0 0.0
    %1020 = vmatpush.msra.mxu0 0.0
    %1021 = vmatpush.msra.mxu0 %v222
    %1022 = vmatpush.msra.mxu0 %v218
    %1023 = vmatpush.msra.mxu0 %v214
    %1024 = vmatpush.msra.mxu0 %v210
    %1025 = vmatpush.msra.mxu0 %v206
    %1026 = vmatpush.msra.mxu0 %v202
    %1027 = vmatpush.msra.mxu0 %v198
    %1028 = vmatpush.msra.mxu0 %v194
    %1029 = vmatmul.f32.gmra.mxu0 %v991
    %v1030 = vpop.f32.mrf.mxu0
    %v1031 = vadd.f32 %v468, %v1030
    %1032 = vdwg.mxu0
    %1033 = vmatpush.msra.mxu0 0.0
    %1034 = vmatpush.msra.mxu0 0.0
    %1035 = vmatpush.msra.mxu0 0.0
    %1036 = vmatpush.msra.mxu0 0.0
    %1037 = vmatpush.msra.mxu0 0.0
    %1038 = vmatpush.msra.mxu0 0.0
    %1039 = vmatpush.msra.mxu0 0.0
    %1040 = vmatpush.msra.mxu0 0.0
    %1041 = vmatpush.msra.mxu0 %v223
    %1042 = vmatpush.msra.mxu0 %v219
    %1043 = vmatpush.msra.mxu0 %v215
    %1044 = vmatpush.msra.mxu0 %v211
    %1045 = vmatpush.msra.mxu0 %v207
    %1046 = vmatpush.msra.mxu0 %v203
    %1047 = vmatpush.msra.mxu0 %v199
    %1048 = vmatpush.msra.mxu0 %v195
    %1049 = vmatmul.f32.gmra.mxu0 %v991
    %v1050 = vpop.f32.mrf.mxu0
    %v1051 = vadd.f32 %v469, %v1050
    %1052 = vdwg.mxu0
    %1053 = vmatpush.msra.mxu0 0.0
    %1054 = vmatpush.msra.mxu0 0.0
    %1055 = vmatpush.msra.mxu0 0.0
    %1056 = vmatpush.msra.mxu0 0.0
    %1057 = vmatpush.msra.mxu0 0.0
    %1058 = vmatpush.msra.mxu0 0.0
    %1059 = vmatpush.msra.mxu0 0.0
    %1060 = vmatpush.msra.mxu0 0.0
    %1061 = vmatpush.msra.mxu0 %v224
    %1062 = vmatpush.msra.mxu0 %v220
    %1063 = vmatpush.msra.mxu0 %v216
    %1064 = vmatpush.msra.mxu0 %v212
    %1065 = vmatpush.msra.mxu0 %v208
    %1066 = vmatpush.msra.mxu0 %v204
    %1067 = vmatpush.msra.mxu0 %v200
    %1068 = vmatpush.msra.mxu0 %v196
    %1069 = vmatmul.f32.gmra.mxu0 %v991
    %v1070 = vpop.f32.mrf.mxu0
    %v1071 = vadd.f32 %v470, %v1070
    %1072 = vdwg.mxu0
    %v1073 = vxor.u32 %v1011, 2147483648
    %v1074 = vxor.u32 %v1031, 2147483648
    %v1075 = vmul.f32 %v1073, 1.442695
    %v1076 = vpow.pop %v1075
    %v1077 = vmul.f32 %v1074, 1.442695
    %v1078 = vpow.pop %v1077
    %v1079 = vadd.f32 %v1076, 1.0
    %v1080 = vadd.f32 %v1078, 1.0
    %v1081 = vrcp.pop %v1079
    %v1082 = vmul.f32 %v1079, %v1081
    %v1083 = vsub.f32 1.0, %v1082
    %v1084 = vmul.f32 %v1081, %v1083
    %v1085 = vadd.f32 %v1081, %v1084
    %vm1086 = vweird.f32 %v1079
    %vm1087 = vweird.f32 %v1081
    %vm1088 = vmor %vm1086, %vm1087
    %v1089 = vsel %vm1088, %v1081, %v1085
    %v1090 = vand.u32 2147483647, %v1079
    %vm1091 = vcmp.eq.f32.partialorder %v1090, 8.507059e+37
    %v1092 = vand.u32 %v1079, 2147483648
    %v1093 = vor.u32 1.1754944e-38, %v1092
    %v1094 = vsel %vm1091, %v1093, %v1089
    %v1095 = vmul.f32 1.0, %v1094
    %v1096 = vrcp.pop %v1080
    %v1097 = vmul.f32 %v1080, %v1096
    %v1098 = vsub.f32 1.0, %v1097
    %v1099 = vmul.f32 %v1096, %v1098
    %v1100 = vadd.f32 %v1096, %v1099
    %vm1101 = vweird.f32 %v1080
    %vm1102 = vweird.f32 %v1096
    %vm1103 = vmor %vm1101, %vm1102
    %v1104 = vsel %vm1103, %v1096, %v1100
    %v1105 = vand.u32 2147483647, %v1080
    %vm1106 = vcmp.eq.f32.partialorder %v1105, 8.507059e+37
    %v1107 = vand.u32 %v1080, 2147483648
    %v1108 = vor.u32 1.1754944e-38, %v1107
    %v1109 = vsel %vm1106, %v1108, %v1104
    %v1110 = vmul.f32 1.0, %v1109
    %v1111 = vmul.f32 %v1095, %v1071
    %v1112 = vadd.f32 %v1051, %v1111
    %v1113 = vtanh.pop %v1112
    %v1114 = vsub.f32 1.0, %v1110
    %v1115 = vmul.f32 %v1114, %v1113
    %v1116 = vmul.f32 %v1110, %v860
    %v1117 = vadd.f32 %v1115, %v1116
    %v1119 = vrot.slane %v982, 6
    %v1120 = vsel %vm233, %v1119, 0
    %1122 = vmatpush.msra.mxu0 0.0
    %1123 = vmatpush.msra.mxu0 0.0
    %1124 = vmatpush.msra.mxu0 0.0
    %1125 = vmatpush.msra.mxu0 0.0
    %1126 = vmatpush.msra.mxu0 0.0
    %1127 = vmatpush.msra.mxu0 0.0
    %1128 = vmatpush.msra.mxu0 0.0
    %1129 = vmatpush.msra.mxu0 0.0
    %1130 = vmatpush.msra.mxu0 0.0
    %1131 = vmatpush.msra.mxu0 0.0
    %1132 = vmatpush.msra.mxu0 0.0
    %1133 = vmatpush.msra.mxu0 0.0
    %1134 = vmatpush.msra.mxu0 %v189
    %1135 = vmatpush.msra.mxu0 %v186
    %1136 = vmatpush.msra.mxu0 %v183
    %1137 = vmatpush.msra.mxu0 %v180
    %1138 = vmatmul.f32.gmra.mxu0 %v1120
    %v1139 = vpop.f32.mrf.mxu0
    %v1140 = vadd.f32 %v227, %v1139
    %1141 = vdwg.mxu0
    %1142 = vmatpush.msra.mxu0 0.0
    %1143 = vmatpush.msra.mxu0 0.0
    %1144 = vmatpush.msra.mxu0 0.0
    %1145 = vmatpush.msra.mxu0 0.0
    %1146 = vmatpush.msra.mxu0 0.0
    %1147 = vmatpush.msra.mxu0 0.0
    %1148 = vmatpush.msra.mxu0 0.0
    %1149 = vmatpush.msra.mxu0 0.0
    %1150 = vmatpush.msra.mxu0 0.0
    %1151 = vmatpush.msra.mxu0 0.0
    %1152 = vmatpush.msra.mxu0 0.0
    %1153 = vmatpush.msra.mxu0 0.0
    %1154 = vmatpush.msra.mxu0 %v190
    %1155 = vmatpush.msra.mxu0 %v187
    %1156 = vmatpush.msra.mxu0 %v184
    %1157 = vmatpush.msra.mxu0 %v181
    %1158 = vmatmul.f32.gmra.mxu0 %v1120
    %v1159 = vpop.f32.mrf.mxu0
    %v1160 = vadd.f32 %v228, %v1159
    %1161 = vdwg.mxu0
    %1162 = vmatpush.msra.mxu0 0.0
    %1163 = vmatpush.msra.mxu0 0.0
    %1164 = vmatpush.msra.mxu0 0.0
    %1165 = vmatpush.msra.mxu0 0.0
    %1166 = vmatpush.msra.mxu0 0.0
    %1167 = vmatpush.msra.mxu0 0.0
    %1168 = vmatpush.msra.mxu0 0.0
    %1169 = vmatpush.msra.mxu0 0.0
    %1170 = vmatpush.msra.mxu0 0.0
    %1171 = vmatpush.msra.mxu0 0.0
    %1172 = vmatpush.msra.mxu0 0.0
    %1173 = vmatpush.msra.mxu0 0.0
    %1174 = vmatpush.msra.mxu0 %v191
    %1175 = vmatpush.msra.mxu0 %v188
    %1176 = vmatpush.msra.mxu0 %v185
    %1177 = vmatpush.msra.mxu0 %v182
    %1178 = vmatmul.f32.gmra.mxu0 %v1120
    %v1179 = vpop.f32.mrf.mxu0
    %v1180 = vadd.f32 %v229, %v1179
    %1181 = vdwg.mxu0
    %v1182 = vadd.f32 %v132, %v1140
    %v1183 = vadd.f32 %v155, %v1160
    %v1184 = vxor.u32 %v1182, 2147483648
    %v1185 = vxor.u32 %v1183, 2147483648
    %v1186 = vmul.f32 %v1184, 1.442695
    %v1187 = vpow.pop %v1186
    %v1188 = vmul.f32 %v1185, 1.442695
    %v1189 = vpow.pop %v1188
    %v1190 = vadd.f32 %v1187, 1.0
    %v1191 = vadd.f32 %v1189, 1.0
    %v1192 = vrcp.pop %v1190
    %v1193 = vmul.f32 %v1190, %v1192
    %v1194 = vsub.f32 1.0, %v1193
    %v1195 = vmul.f32 %v1192, %v1194
    %v1196 = vadd.f32 %v1192, %v1195
    %vm1197 = vweird.f32 %v1190
    %vm1198 = vweird.f32 %v1192
    %vm1199 = vmor %vm1197, %vm1198
    %v1200 = vsel %vm1199, %v1192, %v1196
    %v1201 = vand.u32 2147483647, %v1190
    %vm1202 = vcmp.eq.f32.partialorder %v1201, 8.507059e+37
    %v1203 = vand.u32 %v1190, 2147483648
    %v1204 = vor.u32 1.1754944e-38, %v1203
    %v1205 = vsel %vm1202, %v1204, %v1200
    %v1206 = vmul.f32 1.0, %v1205
    %v1207 = vrcp.pop %v1191
    %v1208 = vmul.f32 %v1191, %v1207
    %v1209 = vsub.f32 1.0, %v1208
    %v1210 = vmul.f32 %v1207, %v1209
    %v1211 = vadd.f32 %v1207, %v1210
    %vm1212 = vweird.f32 %v1191
    %vm1213 = vweird.f32 %v1207
    %vm1214 = vmor %vm1212, %vm1213
    %v1215 = vsel %vm1214, %v1207, %v1211
    %v1216 = vand.u32 2147483647, %v1191
    %vm1217 = vcmp.eq.f32.partialorder %v1216, 8.507059e+37
    %v1218 = vand.u32 %v1191, 2147483648
    %v1219 = vor.u32 1.1754944e-38, %v1218
    %v1220 = vsel %vm1217, %v1219, %v1215
    %v1221 = vmul.f32 1.0, %v1220
    %v1222 = vmul.f32 %v1206, %v1180
    %v1223 = vadd.f32 %v178, %v1222
    %v1224 = vtanh.pop %v1223
    %v1225 = vsub.f32 1.0, %v1221
    %v1226 = vmul.f32 %v1225, %v1224
    %v1228 = vmul.f32 %v1221, %v1119
    %v1229 = vadd.f32 %v1226, %v1228
    %v1231 = vrot.slane %v1117, 2
    %1232 = vrot.lane.b32.xlu0 %v1231, 32
    %v1233 = vpop.permute.xlu0 %1232
    %v1235 = vsel %vm233, %v982, %v1233
    %v1237 = vrot.slane %v1235, 6
    %v1238 = vsel %vm475, %v1237, 0
    %1240 = vmatpush.msra.mxu0 0.0
    %1241 = vmatpush.msra.mxu0 0.0
    %1242 = vmatpush.msra.mxu0 0.0
    %1243 = vmatpush.msra.mxu0 0.0
    %1244 = vmatpush.msra.mxu0 0.0
    %1245 = vmatpush.msra.mxu0 0.0
    %1246 = vmatpush.msra.mxu0 0.0
    %1247 = vmatpush.msra.mxu0 0.0
    %1248 = vmatpush.msra.mxu0 %v221
    %1249 = vmatpush.msra.mxu0 %v217
    %1250 = vmatpush.msra.mxu0 %v213
    %1251 = vmatpush.msra.mxu0 %v209
    %1252 = vmatpush.msra.mxu0 %v205
    %1253 = vmatpush.msra.mxu0 %v201
    %1254 = vmatpush.msra.mxu0 %v197
    %1255 = vmatpush.msra.mxu0 %v193
    %1256 = vmatmul.f32.gmra.mxu0 %v1238
    %v1257 = vpop.f32.mrf.mxu0
    %v1258 = vadd.f32 %v467, %v1257
    %1259 = vdwg.mxu0
    %1260 = vmatpush.msra.mxu0 0.0
    %1261 = vmatpush.msra.mxu0 0.0
    %1262 = vmatpush.msra.mxu0 0.0
    %1263 = vmatpush.msra.mxu0 0.0
    %1264 = vmatpush.msra.mxu0 0.0
    %1265 = vmatpush.msra.mxu0 0.0
    %1266 = vmatpush.msra.mxu0 0.0
    %1267 = vmatpush.msra.mxu0 0.0
    %1268 = vmatpush.msra.mxu0 %v222
    %1269 = vmatpush.msra.mxu0 %v218
    %1270 = vmatpush.msra.mxu0 %v214
    %1271 = vmatpush.msra.mxu0 %v210
    %1272 = vmatpush.msra.mxu0 %v206
    %1273 = vmatpush.msra.mxu0 %v202
    %1274 = vmatpush.msra.mxu0 %v198
    %1275 = vmatpush.msra.mxu0 %v194
    %1276 = vmatmul.f32.gmra.mxu0 %v1238
    %v1277 = vpop.f32.mrf.mxu0
    %v1278 = vadd.f32 %v468, %v1277
    %1279 = vdwg.mxu0
    %1280 = vmatpush.msra.mxu0 0.0
    %1281 = vmatpush.msra.mxu0 0.0
    %1282 = vmatpush.msra.mxu0 0.0
    %1283 = vmatpush.msra.mxu0 0.0
    %1284 = vmatpush.msra.mxu0 0.0
    %1285 = vmatpush.msra.mxu0 0.0
    %1286 = vmatpush.msra.mxu0 0.0
    %1287 = vmatpush.msra.mxu0 0.0
    %1288 = vmatpush.msra.mxu0 %v223
    %1289 = vmatpush.msra.mxu0 %v219
    %1290 = vmatpush.msra.mxu0 %v215
    %1291 = vmatpush.msra.mxu0 %v211
    %1292 = vmatpush.msra.mxu0 %v207
    %1293 = vmatpush.msra.mxu0 %v203
    %1294 = vmatpush.msra.mxu0 %v199
    %1295 = vmatpush.msra.mxu0 %v195
    %1296 = vmatmul.f32.gmra.mxu0 %v1238
    %v1297 = vpop.f32.mrf.mxu0
    %v1298 = vadd.f32 %v469, %v1297
    %1299 = vdwg.mxu0
    %1300 = vmatpush.msra.mxu0 0.0
    %1301 = vmatpush.msra.mxu0 0.0
    %1302 = vmatpush.msra.mxu0 0.0
    %1303 = vmatpush.msra.mxu0 0.0
    %1304 = vmatpush.msra.mxu0 0.0
    %1305 = vmatpush.msra.mxu0 0.0
    %1306 = vmatpush.msra.mxu0 0.0
    %1307 = vmatpush.msra.mxu0 0.0
    %1308 = vmatpush.msra.mxu0 %v224
    %1309 = vmatpush.msra.mxu0 %v220
    %1310 = vmatpush.msra.mxu0 %v216
    %1311 = vmatpush.msra.mxu0 %v212
    %1312 = vmatpush.msra.mxu0 %v208
    %1313 = vmatpush.msra.mxu0 %v204
    %1314 = vmatpush.msra.mxu0 %v200
    %1315 = vmatpush.msra.mxu0 %v196
    %1316 = vmatmul.f32.gmra.mxu0 %v1238
    %v1317 = vpop.f32.mrf.mxu0
    %v1318 = vadd.f32 %v470, %v1317
    %1319 = vdwg.mxu0
    %v1320 = vxor.u32 %v1258, 2147483648
    %v1321 = vxor.u32 %v1278, 2147483648
    %v1322 = vmul.f32 %v1320, 1.442695
    %v1323 = vpow.pop %v1322
    %v1324 = vmul.f32 %v1321, 1.442695
    %v1325 = vpow.pop %v1324
    %v1326 = vadd.f32 %v1323, 1.0
    %v1327 = vadd.f32 %v1325, 1.0
    %v1328 = vrcp.pop %v1326
    %v1329 = vmul.f32 %v1326, %v1328
    %v1330 = vsub.f32 1.0, %v1329
    %v1331 = vmul.f32 %v1328, %v1330
    %v1332 = vadd.f32 %v1328, %v1331
    %vm1333 = vweird.f32 %v1326
    %vm1334 = vweird.f32 %v1328
    %vm1335 = vmor %vm1333, %vm1334
    %v1336 = vsel %vm1335, %v1328, %v1332
    %v1337 = vand.u32 2147483647, %v1326
    %vm1338 = vcmp.eq.f32.partialorder %v1337, 8.507059e+37
    %v1339 = vand.u32 %v1326, 2147483648
    %v1340 = vor.u32 1.1754944e-38, %v1339
    %v1341 = vsel %vm1338, %v1340, %v1336
    %v1342 = vmul.f32 1.0, %v1341
    %v1343 = vrcp.pop %v1327
    %v1344 = vmul.f32 %v1327, %v1343
    %v1345 = vsub.f32 1.0, %v1344
    %v1346 = vmul.f32 %v1343, %v1345
    %v1347 = vadd.f32 %v1343, %v1346
    %vm1348 = vweird.f32 %v1327
    %vm1349 = vweird.f32 %v1343
    %vm1350 = vmor %vm1348, %vm1349
    %v1351 = vsel %vm1350, %v1343, %v1347
    %v1352 = vand.u32 2147483647, %v1327
    %vm1353 = vcmp.eq.f32.partialorder %v1352, 8.507059e+37
    %v1354 = vand.u32 %v1327, 2147483648
    %v1355 = vor.u32 1.1754944e-38, %v1354
    %v1356 = vsel %vm1353, %v1355, %v1351
    %v1357 = vmul.f32 1.0, %v1356
    %v1358 = vmul.f32 %v1342, %v1318
    %v1359 = vadd.f32 %v1298, %v1358
    %v1360 = vtanh.pop %v1359
    %v1361 = vsub.f32 1.0, %v1357
    %v1362 = vmul.f32 %v1361, %v1360
    %v1363 = vmul.f32 %v1357, %v1117
    %v1364 = vadd.f32 %v1362, %v1363
    %v1366 = vsel %vm233, %v1229, 0
    %1368 = vmatpush.msra.mxu0 0.0
    %1369 = vmatpush.msra.mxu0 0.0
    %1370 = vmatpush.msra.mxu0 0.0
    %1371 = vmatpush.msra.mxu0 0.0
    %1372 = vmatpush.msra.mxu0 0.0
    %1373 = vmatpush.msra.mxu0 0.0
    %1374 = vmatpush.msra.mxu0 0.0
    %1375 = vmatpush.msra.mxu0 0.0
    %1376 = vmatpush.msra.mxu0 0.0
    %1377 = vmatpush.msra.mxu0 0.0
    %1378 = vmatpush.msra.mxu0 0.0
    %1379 = vmatpush.msra.mxu0 0.0
    %1380 = vmatpush.msra.mxu0 %v189
    %1381 = vmatpush.msra.mxu0 %v186
    %1382 = vmatpush.msra.mxu0 %v183
    %1383 = vmatpush.msra.mxu0 %v180
    %1384 = vmatmul.f32.gmra.mxu0 %v1366
    %v1385 = vpop.f32.mrf.mxu0
    %v1386 = vadd.f32 %v227, %v1385
    %1387 = vdwg.mxu0
    %1388 = vmatpush.msra.mxu0 0.0
    %1389 = vmatpush.msra.mxu0 0.0
    %1390 = vmatpush.msra.mxu0 0.0
    %1391 = vmatpush.msra.mxu0 0.0
    %1392 = vmatpush.msra.mxu0 0.0
    %1393 = vmatpush.msra.mxu0 0.0
    %1394 = vmatpush.msra.mxu0 0.0
    %1395 = vmatpush.msra.mxu0 0.0
    %1396 = vmatpush.msra.mxu0 0.0
    %1397 = vmatpush.msra.mxu0 0.0
    %1398 = vmatpush.msra.mxu0 0.0
    %1399 = vmatpush.msra.mxu0 0.0
    %1400 = vmatpush.msra.mxu0 %v190
    %1401 = vmatpush.msra.mxu0 %v187
    %1402 = vmatpush.msra.mxu0 %v184
    %1403 = vmatpush.msra.mxu0 %v181
    %1404 = vmatmul.f32.gmra.mxu0 %v1366
    %v1405 = vpop.f32.mrf.mxu0
    %v1406 = vadd.f32 %v228, %v1405
    %1407 = vdwg.mxu0
    %1408 = vmatpush.msra.mxu0 0.0
    %1409 = vmatpush.msra.mxu0 0.0
    %1410 = vmatpush.msra.mxu0 0.0
    %1411 = vmatpush.msra.mxu0 0.0
    %1412 = vmatpush.msra.mxu0 0.0
    %1413 = vmatpush.msra.mxu0 0.0
    %1414 = vmatpush.msra.mxu0 0.0
    %1415 = vmatpush.msra.mxu0 0.0
    %1416 = vmatpush.msra.mxu0 0.0
    %1417 = vmatpush.msra.mxu0 0.0
    %1418 = vmatpush.msra.mxu0 0.0
    %1419 = vmatpush.msra.mxu0 0.0
    %1420 = vmatpush.msra.mxu0 %v191
    %1421 = vmatpush.msra.mxu0 %v188
    %1422 = vmatpush.msra.mxu0 %v185
    %1423 = vmatpush.msra.mxu0 %v182
    %1424 = vmatmul.f32.gmra.mxu0 %v1366
    %v1425 = vpop.f32.mrf.mxu0
    %v1426 = vadd.f32 %v229, %v1425
    %1427 = vdwg.mxu0
    %v1430 = vrot.slane %v1386, 6
    %v1431 = vrot.slane %v1406, 6
    %v1434 = vadd.f32 %v132, %v1430
    %v1435 = vadd.f32 %v155, %v1431
    %v1436 = vxor.u32 %v1434, 2147483648
    %v1437 = vxor.u32 %v1435, 2147483648
    %v1438 = vmul.f32 %v1436, 1.442695
    %v1439 = vpow.pop %v1438
    %v1440 = vmul.f32 %v1437, 1.442695
    %v1441 = vpow.pop %v1440
    %v1442 = vadd.f32 %v1439, 1.0
    %v1443 = vadd.f32 %v1441, 1.0
    %v1444 = vrcp.pop %v1442
    %v1445 = vmul.f32 %v1442, %v1444
    %v1446 = vsub.f32 1.0, %v1445
    %v1447 = vmul.f32 %v1444, %v1446
    %v1448 = vadd.f32 %v1444, %v1447
    %vm1449 = vweird.f32 %v1442
    %vm1450 = vweird.f32 %v1444
    %vm1451 = vmor %vm1449, %vm1450
    %v1452 = vsel %vm1451, %v1444, %v1448
    %v1453 = vand.u32 2147483647, %v1442
    %vm1454 = vcmp.eq.f32.partialorder %v1453, 8.507059e+37
    %v1455 = vand.u32 %v1442, 2147483648
    %v1456 = vor.u32 1.1754944e-38, %v1455
    %v1457 = vsel %vm1454, %v1456, %v1452
    %v1458 = vmul.f32 1.0, %v1457
    %v1459 = vrcp.pop %v1443
    %v1460 = vmul.f32 %v1443, %v1459
    %v1461 = vsub.f32 1.0, %v1460
    %v1462 = vmul.f32 %v1459, %v1461
    %v1463 = vadd.f32 %v1459, %v1462
    %vm1464 = vweird.f32 %v1443
    %vm1465 = vweird.f32 %v1459
    %vm1466 = vmor %vm1464, %vm1465
    %v1467 = vsel %vm1466, %v1459, %v1463
    %v1468 = vand.u32 2147483647, %v1443
    %vm1469 = vcmp.eq.f32.partialorder %v1468, 8.507059e+37
    %v1470 = vand.u32 %v1443, 2147483648
    %v1471 = vor.u32 1.1754944e-38, %v1470
    %v1472 = vsel %vm1469, %v1471, %v1467
    %v1473 = vmul.f32 1.0, %v1472
    %v1475 = vrot.slane %v1426, 6
    %v1477 = vmul.f32 %v1458, %v1475
    %v1478 = vadd.f32 %v178, %v1477
    %v1479 = vtanh.pop %v1478
    %v1480 = vsub.f32 1.0, %v1473
    %v1481 = vmul.f32 %v1480, %v1479
    %v1482 = vrot.slane %v1229, 6
    %v1484 = vmul.f32 %v1473, %v1482
    %v1485 = vadd.f32 %v1481, %v1484
    %1487 = vrot.lane.b32.xlu0 %v1364, 32
    %v1488 = vpop.permute.xlu0 %1487
    %v1490 = vsel %vm233, %v1229, %v1488
    %v1492 = vsel %vm475, %v1490, 0
    %1494 = vmatpush.msra.mxu0 0.0
    %1495 = vmatpush.msra.mxu0 0.0
    %1496 = vmatpush.msra.mxu0 0.0
    %1497 = vmatpush.msra.mxu0 0.0
    %1498 = vmatpush.msra.mxu0 0.0
    %1499 = vmatpush.msra.mxu0 0.0
    %1500 = vmatpush.msra.mxu0 0.0
    %1501 = vmatpush.msra.mxu0 0.0
    %1502 = vmatpush.msra.mxu0 %v221
    %1503 = vmatpush.msra.mxu0 %v217
    %1504 = vmatpush.msra.mxu0 %v213
    %1505 = vmatpush.msra.mxu0 %v209
    %1506 = vmatpush.msra.mxu0 %v205
    %1507 = vmatpush.msra.mxu0 %v201
    %1508 = vmatpush.msra.mxu0 %v197
    %1509 = vmatpush.msra.mxu0 %v193
    %1510 = vmatmul.f32.gmra.mxu0 %v1492
    %v1511 = vpop.f32.mrf.mxu0
    %v1512 = vadd.f32 %v467, %v1511
    %1513 = vdwg.mxu0
    %1514 = vmatpush.msra.mxu0 0.0
    %1515 = vmatpush.msra.mxu0 0.0
    %1516 = vmatpush.msra.mxu0 0.0
    %1517 = vmatpush.msra.mxu0 0.0
    %1518 = vmatpush.msra.mxu0 0.0
    %1519 = vmatpush.msra.mxu0 0.0
    %1520 = vmatpush.msra.mxu0 0.0
    %1521 = vmatpush.msra.mxu0 0.0
    %1522 = vmatpush.msra.mxu0 %v222
    %1523 = vmatpush.msra.mxu0 %v218
    %1524 = vmatpush.msra.mxu0 %v214
    %1525 = vmatpush.msra.mxu0 %v210
    %1526 = vmatpush.msra.mxu0 %v206
    %1527 = vmatpush.msra.mxu0 %v202
    %1528 = vmatpush.msra.mxu0 %v198
    %1529 = vmatpush.msra.mxu0 %v194
    %1530 = vmatmul.f32.gmra.mxu0 %v1492
    %v1531 = vpop.f32.mrf.mxu0
    %v1532 = vadd.f32 %v468, %v1531
    %1533 = vdwg.mxu0
    %1534 = vmatpush.msra.mxu0 0.0
    %1535 = vmatpush.msra.mxu0 0.0
    %1536 = vmatpush.msra.mxu0 0.0
    %1537 = vmatpush.msra.mxu0 0.0
    %1538 = vmatpush.msra.mxu0 0.0
    %1539 = vmatpush.msra.mxu0 0.0
    %1540 = vmatpush.msra.mxu0 0.0
    %1541 = vmatpush.msra.mxu0 0.0
    %1542 = vmatpush.msra.mxu0 %v223
    %1543 = vmatpush.msra.mxu0 %v219
    %1544 = vmatpush.msra.mxu0 %v215
    %1545 = vmatpush.msra.mxu0 %v211
    %1546 = vmatpush.msra.mxu0 %v207
    %1547 = vmatpush.msra.mxu0 %v203
    %1548 = vmatpush.msra.mxu0 %v199
    %1549 = vmatpush.msra.mxu0 %v195
    %1550 = vmatmul.f32.gmra.mxu0 %v1492
    %v1551 = vpop.f32.mrf.mxu0
    %v1552 = vadd.f32 %v469, %v1551
    %1553 = vdwg.mxu0
    %1554 = vmatpush.msra.mxu0 0.0
    %1555 = vmatpush.msra.mxu0 0.0
    %1556 = vmatpush.msra.mxu0 0.0
    %1557 = vmatpush.msra.mxu0 0.0
    %1558 = vmatpush.msra.mxu0 0.0
    %1559 = vmatpush.msra.mxu0 0.0
    %1560 = vmatpush.msra.mxu0 0.0
    %1561 = vmatpush.msra.mxu0 0.0
    %1562 = vmatpush.msra.mxu0 %v224
    %1563 = vmatpush.msra.mxu0 %v220
    %1564 = vmatpush.msra.mxu0 %v216
    %1565 = vmatpush.msra.mxu0 %v212
    %1566 = vmatpush.msra.mxu0 %v208
    %1567 = vmatpush.msra.mxu0 %v204
    %1568 = vmatpush.msra.mxu0 %v200
    %1569 = vmatpush.msra.mxu0 %v196
    %1570 = vmatmul.f32.gmra.mxu0 %v1492
    %v1571 = vpop.f32.mrf.mxu0
    %v1572 = vadd.f32 %v470, %v1571
    %1573 = vdwg.mxu0
    %v1574 = vxor.u32 %v1512, 2147483648
    %v1575 = vxor.u32 %v1532, 2147483648
    %v1576 = vmul.f32 %v1574, 1.442695
    %v1577 = vpow.pop %v1576
    %v1578 = vmul.f32 %v1575, 1.442695
    %v1579 = vpow.pop %v1578
    %v1580 = vadd.f32 %v1577, 1.0
    %v1581 = vadd.f32 %v1579, 1.0
    %v1582 = vrcp.pop %v1580
    %v1583 = vmul.f32 %v1580, %v1582
    %v1584 = vsub.f32 1.0, %v1583
    %v1585 = vmul.f32 %v1582, %v1584
    %v1586 = vadd.f32 %v1582, %v1585
    %vm1587 = vweird.f32 %v1580
    %vm1588 = vweird.f32 %v1582
    %vm1589 = vmor %vm1587, %vm1588
    %v1590 = vsel %vm1589, %v1582, %v1586
    %v1591 = vand.u32 2147483647, %v1580
    %vm1592 = vcmp.eq.f32.partialorder %v1591, 8.507059e+37
    %v1593 = vand.u32 %v1580, 2147483648
    %v1594 = vor.u32 1.1754944e-38, %v1593
    %v1595 = vsel %vm1592, %v1594, %v1590
    %v1596 = vmul.f32 1.0, %v1595
    %v1597 = vrcp.pop %v1581
    %v1598 = vmul.f32 %v1581, %v1597
    %v1599 = vsub.f32 1.0, %v1598
    %v1600 = vmul.f32 %v1597, %v1599
    %v1601 = vadd.f32 %v1597, %v1600
    %vm1602 = vweird.f32 %v1581
    %vm1603 = vweird.f32 %v1597
    %vm1604 = vmor %vm1602, %vm1603
    %v1605 = vsel %vm1604, %v1597, %v1601
    %v1606 = vand.u32 2147483647, %v1581
    %vm1607 = vcmp.eq.f32.partialorder %v1606, 8.507059e+37
    %v1608 = vand.u32 %v1581, 2147483648
    %v1609 = vor.u32 1.1754944e-38, %v1608
    %v1610 = vsel %vm1607, %v1609, %v1605
    %v1611 = vmul.f32 1.0, %v1610
    %v1612 = vmul.f32 %v1596, %v1572
    %v1613 = vadd.f32 %v1552, %v1612
    %v1614 = vtanh.pop %v1613
    %v1615 = vsub.f32 1.0, %v1611
    %v1616 = vmul.f32 %v1615, %v1614
    %v1617 = vmul.f32 %v1611, %v1364
    %v1618 = vadd.f32 %v1616, %v1617
    %v1620 = vrot.slane %v1485, 2
    %v1621 = vsel %vm233, %v1620, 0
    %1623 = vmatpush.msra.mxu0 0.0
    %1624 = vmatpush.msra.mxu0 0.0
    %1625 = vmatpush.msra.mxu0 0.0
    %1626 = vmatpush.msra.mxu0 0.0
    %1627 = vmatpush.msra.mxu0 0.0
    %1628 = vmatpush.msra.mxu0 0.0
    %1629 = vmatpush.msra.mxu0 0.0
    %1630 = vmatpush.msra.mxu0 0.0
    %1631 = vmatpush.msra.mxu0 0.0
    %1632 = vmatpush.msra.mxu0 0.0
    %1633 = vmatpush.msra.mxu0 0.0
    %1634 = vmatpush.msra.mxu0 0.0
    %1635 = vmatpush.msra.mxu0 %v189
    %1636 = vmatpush.msra.mxu0 %v186
    %1637 = vmatpush.msra.mxu0 %v183
    %1638 = vmatpush.msra.mxu0 %v180
    %1639 = vmatmul.f32.gmra.mxu0 %v1621
    %v1640 = vpop.f32.mrf.mxu0
    %v1641 = vadd.f32 %v227, %v1640
    %1642 = vdwg.mxu0
    %1643 = vmatpush.msra.mxu0 0.0
    %1644 = vmatpush.msra.mxu0 0.0
    %1645 = vmatpush.msra.mxu0 0.0
    %1646 = vmatpush.msra.mxu0 0.0
    %1647 = vmatpush.msra.mxu0 0.0
    %1648 = vmatpush.msra.mxu0 0.0
    %1649 = vmatpush.msra.mxu0 0.0
    %1650 = vmatpush.msra.mxu0 0.0
    %1651 = vmatpush.msra.mxu0 0.0
    %1652 = vmatpush.msra.mxu0 0.0
    %1653 = vmatpush.msra.mxu0 0.0
    %1654 = vmatpush.msra.mxu0 0.0
    %1655 = vmatpush.msra.mxu0 %v190
    %1656 = vmatpush.msra.mxu0 %v187
    %1657 = vmatpush.msra.mxu0 %v184
    %1658 = vmatpush.msra.mxu0 %v181
    %1659 = vmatmul.f32.gmra.mxu0 %v1621
    %v1660 = vpop.f32.mrf.mxu0
    %v1661 = vadd.f32 %v228, %v1660
    %1662 = vdwg.mxu0
    %1663 = vmatpush.msra.mxu0 0.0
    %1664 = vmatpush.msra.mxu0 0.0
    %1665 = vmatpush.msra.mxu0 0.0
    %1666 = vmatpush.msra.mxu0 0.0
    %1667 = vmatpush.msra.mxu0 0.0
    %1668 = vmatpush.msra.mxu0 0.0
    %1669 = vmatpush.msra.mxu0 0.0
    %1670 = vmatpush.msra.mxu0 0.0
    %1671 = vmatpush.msra.mxu0 0.0
    %1672 = vmatpush.msra.mxu0 0.0
    %1673 = vmatpush.msra.mxu0 0.0
    %1674 = vmatpush.msra.mxu0 0.0
    %1675 = vmatpush.msra.mxu0 %v191
    %1676 = vmatpush.msra.mxu0 %v188
    %1677 = vmatpush.msra.mxu0 %v185
    %1678 = vmatpush.msra.mxu0 %v182
    %1679 = vmatmul.f32.gmra.mxu0 %v1621
    %v1680 = vpop.f32.mrf.mxu0
    %v1681 = vadd.f32 %v229, %v1680
    %1682 = vdwg.mxu0
    %v1685 = vrot.slane %v1641, 4
    %v1686 = vrot.slane %v1661, 4
    %v1689 = vadd.f32 %v132, %v1685
    %v1690 = vadd.f32 %v155, %v1686
    %v1691 = vxor.u32 %v1689, 2147483648
    %v1692 = vxor.u32 %v1690, 2147483648
    %v1693 = vmul.f32 %v1691, 1.442695
    %v1694 = vpow.pop %v1693
    %v1695 = vmul.f32 %v1692, 1.442695
    %v1696 = vpow.pop %v1695
    %v1697 = vadd.f32 %v1694, 1.0
    %v1698 = vadd.f32 %v1696, 1.0
    %v1699 = vrcp.pop %v1697
    %v1700 = vmul.f32 %v1697, %v1699
    %v1701 = vsub.f32 1.0, %v1700
    %v1702 = vmul.f32 %v1699, %v1701
    %v1703 = vadd.f32 %v1699, %v1702
    %vm1704 = vweird.f32 %v1697
    %vm1705 = vweird.f32 %v1699
    %vm1706 = vmor %vm1704, %vm1705
    %v1707 = vsel %vm1706, %v1699, %v1703
    %v1708 = vand.u32 2147483647, %v1697
    %vm1709 = vcmp.eq.f32.partialorder %v1708, 8.507059e+37
    %v1710 = vand.u32 %v1697, 2147483648
    %v1711 = vor.u32 1.1754944e-38, %v1710
    %v1712 = vsel %vm1709, %v1711, %v1707
    %v1713 = vmul.f32 1.0, %v1712
    %v1714 = vrcp.pop %v1698
    %v1715 = vmul.f32 %v1698, %v1714
    %v1716 = vsub.f32 1.0, %v1715
    %v1717 = vmul.f32 %v1714, %v1716
    %v1718 = vadd.f32 %v1714, %v1717
    %vm1719 = vweird.f32 %v1698
    %vm1720 = vweird.f32 %v1714
    %vm1721 = vmor %vm1719, %vm1720
    %v1722 = vsel %vm1721, %v1714, %v1718
    %v1723 = vand.u32 2147483647, %v1698
    %vm1724 = vcmp.eq.f32.partialorder %v1723, 8.507059e+37
    %v1725 = vand.u32 %v1698, 2147483648
    %v1726 = vor.u32 1.1754944e-38, %v1725
    %v1727 = vsel %vm1724, %v1726, %v1722
    %v1728 = vmul.f32 1.0, %v1727
    %v1730 = vrot.slane %v1681, 4
    %v1732 = vmul.f32 %v1713, %v1730
    %v1733 = vadd.f32 %v178, %v1732
    %v1734 = vtanh.pop %v1733
    %v1735 = vsub.f32 1.0, %v1728
    %v1736 = vmul.f32 %v1735, %v1734
    %v1737 = vrot.slane %v1485, 6
    %v1739 = vmul.f32 %v1728, %v1737
    %v1740 = vadd.f32 %v1736, %v1739
    %v1742 = vrot.slane %v1618, 6
    %1743 = vrot.lane.b32.xlu0 %v1742, 32
    %v1744 = vpop.permute.xlu0 %1743
    %v1746 = vsel %vm233, %v1485, %v1744
    %v1748 = vrot.slane %v1746, 2
    %v1749 = vsel %vm475, %v1748, 0
    %1751 = vmatpush.msra.mxu0 0.0
    %1752 = vmatpush.msra.mxu0 0.0
    %1753 = vmatpush.msra.mxu0 0.0
    %1754 = vmatpush.msra.mxu0 0.0
    %1755 = vmatpush.msra.mxu0 0.0
    %1756 = vmatpush.msra.mxu0 0.0
    %1757 = vmatpush.msra.mxu0 0.0
    %1758 = vmatpush.msra.mxu0 0.0
    %1759 = vmatpush.msra.mxu0 %v221
    %1760 = vmatpush.msra.mxu0 %v217
    %1761 = vmatpush.msra.mxu0 %v213
    %1762 = vmatpush.msra.mxu0 %v209
    %1763 = vmatpush.msra.mxu0 %v205
    %1764 = vmatpush.msra.mxu0 %v201
    %1765 = vmatpush.msra.mxu0 %v197
    %1766 = vmatpush.msra.mxu0 %v193
    %1767 = vmatmul.f32.gmra.mxu0 %v1749
    %v1768 = vpop.f32.mrf.mxu0
    %v1769 = vadd.f32 %v467, %v1768
    %1770 = vdwg.mxu0
    %1771 = vmatpush.msra.mxu0 0.0
    %1772 = vmatpush.msra.mxu0 0.0
    %1773 = vmatpush.msra.mxu0 0.0
    %1774 = vmatpush.msra.mxu0 0.0
    %1775 = vmatpush.msra.mxu0 0.0
    %1776 = vmatpush.msra.mxu0 0.0
    %1777 = vmatpush.msra.mxu0 0.0
    %1778 = vmatpush.msra.mxu0 0.0
    %1779 = vmatpush.msra.mxu0 %v222
    %1780 = vmatpush.msra.mxu0 %v218
    %1781 = vmatpush.msra.mxu0 %v214
    %1782 = vmatpush.msra.mxu0 %v210
    %1783 = vmatpush.msra.mxu0 %v206
    %1784 = vmatpush.msra.mxu0 %v202
    %1785 = vmatpush.msra.mxu0 %v198
    %1786 = vmatpush.msra.mxu0 %v194
    %1787 = vmatmul.f32.gmra.mxu0 %v1749
    %v1788 = vpop.f32.mrf.mxu0
    %v1789 = vadd.f32 %v468, %v1788
    %1790 = vdwg.mxu0
    %1791 = vmatpush.msra.mxu0 0.0
    %1792 = vmatpush.msra.mxu0 0.0
    %1793 = vmatpush.msra.mxu0 0.0
    %1794 = vmatpush.msra.mxu0 0.0
    %1795 = vmatpush.msra.mxu0 0.0
    %1796 = vmatpush.msra.mxu0 0.0
    %1797 = vmatpush.msra.mxu0 0.0
    %1798 = vmatpush.msra.mxu0 0.0
    %1799 = vmatpush.msra.mxu0 %v223
    %1800 = vmatpush.msra.mxu0 %v219
    %1801 = vmatpush.msra.mxu0 %v215
    %1802 = vmatpush.msra.mxu0 %v211
    %1803 = vmatpush.msra.mxu0 %v207
    %1804 = vmatpush.msra.mxu0 %v203
    %1805 = vmatpush.msra.mxu0 %v199
    %1806 = vmatpush.msra.mxu0 %v195
    %1807 = vmatmul.f32.gmra.mxu0 %v1749
    %v1808 = vpop.f32.mrf.mxu0
    %v1809 = vadd.f32 %v469, %v1808
    %1810 = vdwg.mxu0
    %1811 = vmatpush.msra.mxu0 0.0
    %1812 = vmatpush.msra.mxu0 0.0
    %1813 = vmatpush.msra.mxu0 0.0
    %1814 = vmatpush.msra.mxu0 0.0
    %1815 = vmatpush.msra.mxu0 0.0
    %1816 = vmatpush.msra.mxu0 0.0
    %1817 = vmatpush.msra.mxu0 0.0
    %1818 = vmatpush.msra.mxu0 0.0
    %1819 = vmatpush.msra.mxu0 %v224
    %1820 = vmatpush.msra.mxu0 %v220
    %1821 = vmatpush.msra.mxu0 %v216
    %1822 = vmatpush.msra.mxu0 %v212
    %1823 = vmatpush.msra.mxu0 %v208
    %1824 = vmatpush.msra.mxu0 %v204
    %1825 = vmatpush.msra.mxu0 %v200
    %1826 = vmatpush.msra.mxu0 %v196
    %1827 = vmatmul.f32.gmra.mxu0 %v1749
    %v1828 = vpop.f32.mrf.mxu0
    %v1829 = vadd.f32 %v470, %v1828
    %1830 = vdwg.mxu0
    %v1831 = vxor.u32 %v1769, 2147483648
    %v1832 = vxor.u32 %v1789, 2147483648
    %v1833 = vmul.f32 %v1831, 1.442695
    %v1834 = vpow.pop %v1833
    %v1835 = vmul.f32 %v1832, 1.442695
    %v1836 = vpow.pop %v1835
    %v1837 = vadd.f32 %v1834, 1.0
    %v1838 = vadd.f32 %v1836, 1.0
    %v1839 = vrcp.pop %v1837
    %v1840 = vmul.f32 %v1837, %v1839
    %v1841 = vsub.f32 1.0, %v1840
    %v1842 = vmul.f32 %v1839, %v1841
    %v1843 = vadd.f32 %v1839, %v1842
    %vm1844 = vweird.f32 %v1837
    %vm1845 = vweird.f32 %v1839
    %vm1846 = vmor %vm1844, %vm1845
    %v1847 = vsel %vm1846, %v1839, %v1843
    %v1848 = vand.u32 2147483647, %v1837
    %vm1849 = vcmp.eq.f32.partialorder %v1848, 8.507059e+37
    %v1850 = vand.u32 %v1837, 2147483648
    %v1851 = vor.u32 1.1754944e-38, %v1850
    %v1852 = vsel %vm1849, %v1851, %v1847
    %v1853 = vmul.f32 1.0, %v1852
    %v1854 = vrcp.pop %v1838
    %v1855 = vmul.f32 %v1838, %v1854
    %v1856 = vsub.f32 1.0, %v1855
    %v1857 = vmul.f32 %v1854, %v1856
    %v1858 = vadd.f32 %v1854, %v1857
    %vm1859 = vweird.f32 %v1838
    %vm1860 = vweird.f32 %v1854
    %vm1861 = vmor %vm1859, %vm1860
    %v1862 = vsel %vm1861, %v1854, %v1858
    %v1863 = vand.u32 2147483647, %v1838
    %vm1864 = vcmp.eq.f32.partialorder %v1863, 8.507059e+37
    %v1865 = vand.u32 %v1838, 2147483648
    %v1866 = vor.u32 1.1754944e-38, %v1865
    %v1867 = vsel %vm1864, %v1866, %v1862
    %v1868 = vmul.f32 1.0, %v1867
    %v1869 = vmul.f32 %v1853, %v1829
    %v1870 = vadd.f32 %v1809, %v1869
    %v1871 = vtanh.pop %v1870
    %v1872 = vsub.f32 1.0, %v1868
    %v1873 = vmul.f32 %v1872, %v1871
    %v1874 = vmul.f32 %v1868, %v1618
    %v1875 = vadd.f32 %v1873, %v1874
    %v1877 = vrot.slane %v1740, 4
    %v1878 = vsel %vm233, %v1877, 0
    %1880 = vmatpush.msra.mxu0 0.0
    %1881 = vmatpush.msra.mxu0 0.0
    %1882 = vmatpush.msra.mxu0 0.0
    %1883 = vmatpush.msra.mxu0 0.0
    %1884 = vmatpush.msra.mxu0 0.0
    %1885 = vmatpush.msra.mxu0 0.0
    %1886 = vmatpush.msra.mxu0 0.0
    %1887 = vmatpush.msra.mxu0 0.0
    %1888 = vmatpush.msra.mxu0 0.0
    %1889 = vmatpush.msra.mxu0 0.0
    %1890 = vmatpush.msra.mxu0 0.0
    %1891 = vmatpush.msra.mxu0 0.0
    %1892 = vmatpush.msra.mxu0 %v189
    %1893 = vmatpush.msra.mxu0 %v186
    %1894 = vmatpush.msra.mxu0 %v183
    %1895 = vmatpush.msra.mxu0 %v180
    %1896 = vmatmul.f32.gmra.mxu0 %v1878
    %v1897 = vpop.f32.mrf.mxu0
    %v1898 = vadd.f32 %v227, %v1897
    %1899 = vdwg.mxu0
    %1900 = vmatpush.msra.mxu0 0.0
    %1901 = vmatpush.msra.mxu0 0.0
    %1902 = vmatpush.msra.mxu0 0.0
    %1903 = vmatpush.msra.mxu0 0.0
    %1904 = vmatpush.msra.mxu0 0.0
    %1905 = vmatpush.msra.mxu0 0.0
    %1906 = vmatpush.msra.mxu0 0.0
    %1907 = vmatpush.msra.mxu0 0.0
    %1908 = vmatpush.msra.mxu0 0.0
    %1909 = vmatpush.msra.mxu0 0.0
    %1910 = vmatpush.msra.mxu0 0.0
    %1911 = vmatpush.msra.mxu0 0.0
    %1912 = vmatpush.msra.mxu0 %v190
    %1913 = vmatpush.msra.mxu0 %v187
    %1914 = vmatpush.msra.mxu0 %v184
    %1915 = vmatpush.msra.mxu0 %v181
    %1916 = vmatmul.f32.gmra.mxu0 %v1878
    %v1917 = vpop.f32.mrf.mxu0
    %v1918 = vadd.f32 %v228, %v1917
    %1919 = vdwg.mxu0
    %1920 = vmatpush.msra.mxu0 0.0
    %1921 = vmatpush.msra.mxu0 0.0
    %1922 = vmatpush.msra.mxu0 0.0
    %1923 = vmatpush.msra.mxu0 0.0
    %1924 = vmatpush.msra.mxu0 0.0
    %1925 = vmatpush.msra.mxu0 0.0
    %1926 = vmatpush.msra.mxu0 0.0
    %1927 = vmatpush.msra.mxu0 0.0
    %1928 = vmatpush.msra.mxu0 0.0
    %1929 = vmatpush.msra.mxu0 0.0
    %1930 = vmatpush.msra.mxu0 0.0
    %1931 = vmatpush.msra.mxu0 0.0
    %1932 = vmatpush.msra.mxu0 %v191
    %1933 = vmatpush.msra.mxu0 %v188
    %1934 = vmatpush.msra.mxu0 %v185
    %1935 = vmatpush.msra.mxu0 %v182
    %1936 = vmatmul.f32.gmra.mxu0 %v1878
    %v1937 = vpop.f32.mrf.mxu0
    %v1938 = vadd.f32 %v229, %v1937
    %1939 = vdwg.mxu0
    %v1942 = vrot.slane %v1898, 2
    %v1943 = vrot.slane %v1918, 2
    %v1946 = vadd.f32 %v132, %v1942
    %v1947 = vadd.f32 %v155, %v1943
    %v1948 = vxor.u32 %v1946, 2147483648
    %v1949 = vxor.u32 %v1947, 2147483648
    %v1950 = vmul.f32 %v1948, 1.442695
    %v1951 = vpow.pop %v1950
    %v1952 = vmul.f32 %v1949, 1.442695
    %v1953 = vpow.pop %v1952
    %v1954 = vadd.f32 %v1951, 1.0
    %v1955 = vadd.f32 %v1953, 1.0
    %v1956 = vrcp.pop %v1954
    %v1957 = vmul.f32 %v1954, %v1956
    %v1958 = vsub.f32 1.0, %v1957
    %v1959 = vmul.f32 %v1956, %v1958
    %v1960 = vadd.f32 %v1956, %v1959
    %vm1961 = vweird.f32 %v1954
    %vm1962 = vweird.f32 %v1956
    %vm1963 = vmor %vm1961, %vm1962
    %v1964 = vsel %vm1963, %v1956, %v1960
    %v1965 = vand.u32 2147483647, %v1954
    %vm1966 = vcmp.eq.f32.partialorder %v1965, 8.507059e+37
    %v1967 = vand.u32 %v1954, 2147483648
    %v1968 = vor.u32 1.1754944e-38, %v1967
    %v1969 = vsel %vm1966, %v1968, %v1964
    %v1970 = vmul.f32 1.0, %v1969
    %v1971 = vrcp.pop %v1955
    %v1972 = vmul.f32 %v1955, %v1971
    %v1973 = vsub.f32 1.0, %v1972
    %v1974 = vmul.f32 %v1971, %v1973
    %v1975 = vadd.f32 %v1971, %v1974
    %vm1976 = vweird.f32 %v1955
    %vm1977 = vweird.f32 %v1971
    %vm1978 = vmor %vm1976, %vm1977
    %v1979 = vsel %vm1978, %v1971, %v1975
    %v1980 = vand.u32 2147483647, %v1955
    %vm1981 = vcmp.eq.f32.partialorder %v1980, 8.507059e+37
    %v1982 = vand.u32 %v1955, 2147483648
    %v1983 = vor.u32 1.1754944e-38, %v1982
    %v1984 = vsel %vm1981, %v1983, %v1979
    %v1985 = vmul.f32 1.0, %v1984
    %v1987 = vrot.slane %v1938, 2
    %v1989 = vmul.f32 %v1970, %v1987
    %v1990 = vadd.f32 %v178, %v1989
    %v1991 = vtanh.pop %v1990
    %v1992 = vsub.f32 1.0, %v1985
    %v1993 = vmul.f32 %v1992, %v1991
    %v1994 = vrot.slane %v1740, 6
    %v1996 = vmul.f32 %v1985, %v1994
    %v1997 = vadd.f32 %v1993, %v1996
    %v1999 = vrot.slane %v1875, 4
    %2000 = vrot.lane.b32.xlu0 %v1999, 32
    %v2001 = vpop.permute.xlu0 %2000
    %v2003 = vsel %vm233, %v1740, %v2001
    %v2005 = vrot.slane %v2003, 4
    %v2006 = vsel %vm475, %v2005, 0
    %2008 = vmatpush.msra.mxu0 0.0
    %2009 = vmatpush.msra.mxu0 0.0
    %2010 = vmatpush.msra.mxu0 0.0
    %2011 = vmatpush.msra.mxu0 0.0
    %2012 = vmatpush.msra.mxu0 0.0
    %2013 = vmatpush.msra.mxu0 0.0
    %2014 = vmatpush.msra.mxu0 0.0
    %2015 = vmatpush.msra.mxu0 0.0
    %2016 = vmatpush.msra.mxu0 %v221
    %2017 = vmatpush.msra.mxu0 %v217
    %2018 = vmatpush.msra.mxu0 %v213
    %2019 = vmatpush.msra.mxu0 %v209
    %2020 = vmatpush.msra.mxu0 %v205
    %2021 = vmatpush.msra.mxu0 %v201
    %2022 = vmatpush.msra.mxu0 %v197
    %2023 = vmatpush.msra.mxu0 %v193
    %2024 = vmatmul.f32.gmra.mxu0 %v2006
    %v2025 = vpop.f32.mrf.mxu0
    %v2026 = vadd.f32 %v467, %v2025
    %2027 = vdwg.mxu0
    %2028 = vmatpush.msra.mxu0 0.0
    %2029 = vmatpush.msra.mxu0 0.0
    %2030 = vmatpush.msra.mxu0 0.0
    %2031 = vmatpush.msra.mxu0 0.0
    %2032 = vmatpush.msra.mxu0 0.0
    %2033 = vmatpush.msra.mxu0 0.0
    %2034 = vmatpush.msra.mxu0 0.0
    %2035 = vmatpush.msra.mxu0 0.0
    %2036 = vmatpush.msra.mxu0 %v222
    %2037 = vmatpush.msra.mxu0 %v218
    %2038 = vmatpush.msra.mxu0 %v214
    %2039 = vmatpush.msra.mxu0 %v210
    %2040 = vmatpush.msra.mxu0 %v206
    %2041 = vmatpush.msra.mxu0 %v202
    %2042 = vmatpush.msra.mxu0 %v198
    %2043 = vmatpush.msra.mxu0 %v194
    %2044 = vmatmul.f32.gmra.mxu0 %v2006
    %v2045 = vpop.f32.mrf.mxu0
    %v2046 = vadd.f32 %v468, %v2045
    %2047 = vdwg.mxu0
    %2048 = vmatpush.msra.mxu0 0.0
    %2049 = vmatpush.msra.mxu0 0.0
    %2050 = vmatpush.msra.mxu0 0.0
    %2051 = vmatpush.msra.mxu0 0.0
    %2052 = vmatpush.msra.mxu0 0.0
    %2053 = vmatpush.msra.mxu0 0.0
    %2054 = vmatpush.msra.mxu0 0.0
    %2055 = vmatpush.msra.mxu0 0.0
    %2056 = vmatpush.msra.mxu0 %v223
    %2057 = vmatpush.msra.mxu0 %v219
    %2058 = vmatpush.msra.mxu0 %v215
    %2059 = vmatpush.msra.mxu0 %v211
    %2060 = vmatpush.msra.mxu0 %v207
    %2061 = vmatpush.msra.mxu0 %v203
    %2062 = vmatpush.msra.mxu0 %v199
    %2063 = vmatpush.msra.mxu0 %v195
    %2064 = vmatmul.f32.gmra.mxu0 %v2006
    %v2065 = vpop.f32.mrf.mxu0
    %v2066 = vadd.f32 %v469, %v2065
    %2067 = vdwg.mxu0
    %2068 = vmatpush.msra.mxu0 0.0
    %2069 = vmatpush.msra.mxu0 0.0
    %2070 = vmatpush.msra.mxu0 0.0
    %2071 = vmatpush.msra.mxu0 0.0
    %2072 = vmatpush.msra.mxu0 0.0
    %2073 = vmatpush.msra.mxu0 0.0
    %2074 = vmatpush.msra.mxu0 0.0
    %2075 = vmatpush.msra.mxu0 0.0
    %2076 = vmatpush.msra.mxu0 %v224
    %2077 = vmatpush.msra.mxu0 %v220
    %2078 = vmatpush.msra.mxu0 %v216
    %2079 = vmatpush.msra.mxu0 %v212
    %2080 = vmatpush.msra.mxu0 %v208
    %2081 = vmatpush.msra.mxu0 %v204
    %2082 = vmatpush.msra.mxu0 %v200
    %2083 = vmatpush.msra.mxu0 %v196
    %2084 = vmatmul.f32.gmra.mxu0 %v2006
    %v2085 = vpop.f32.mrf.mxu0
    %v2086 = vadd.f32 %v470, %v2085
    %2087 = vdwg.mxu0
    %v2088 = vxor.u32 %v2026, 2147483648
    %v2089 = vxor.u32 %v2046, 2147483648
    %v2090 = vmul.f32 %v2088, 1.442695
    %v2091 = vpow.pop %v2090
    %v2092 = vmul.f32 %v2089, 1.442695
    %v2093 = vpow.pop %v2092
    %v2094 = vadd.f32 %v2091, 1.0
    %v2095 = vadd.f32 %v2093, 1.0
    %v2096 = vrcp.pop %v2094
    %v2097 = vmul.f32 %v2094, %v2096
    %v2098 = vsub.f32 1.0, %v2097
    %v2099 = vmul.f32 %v2096, %v2098
    %v2100 = vadd.f32 %v2096, %v2099
    %vm2101 = vweird.f32 %v2094
    %vm2102 = vweird.f32 %v2096
    %vm2103 = vmor %vm2101, %vm2102
    %v2104 = vsel %vm2103, %v2096, %v2100
    %v2105 = vand.u32 2147483647, %v2094
    %vm2106 = vcmp.eq.f32.partialorder %v2105, 8.507059e+37
    %v2107 = vand.u32 %v2094, 2147483648
    %v2108 = vor.u32 1.1754944e-38, %v2107
    %v2109 = vsel %vm2106, %v2108, %v2104
    %v2110 = vmul.f32 1.0, %v2109
    %v2111 = vrcp.pop %v2095
    %v2112 = vmul.f32 %v2095, %v2111
    %v2113 = vsub.f32 1.0, %v2112
    %v2114 = vmul.f32 %v2111, %v2113
    %v2115 = vadd.f32 %v2111, %v2114
    %vm2116 = vweird.f32 %v2095
    %vm2117 = vweird.f32 %v2111
    %vm2118 = vmor %vm2116, %vm2117
    %v2119 = vsel %vm2118, %v2111, %v2115
    %v2120 = vand.u32 2147483647, %v2095
    %vm2121 = vcmp.eq.f32.partialorder %v2120, 8.507059e+37
    %v2122 = vand.u32 %v2095, 2147483648
    %v2123 = vor.u32 1.1754944e-38, %v2122
    %v2124 = vsel %vm2121, %v2123, %v2119
    %v2125 = vmul.f32 1.0, %v2124
    %v2126 = vmul.f32 %v2110, %v2086
    %v2127 = vadd.f32 %v2066, %v2126
    %v2128 = vtanh.pop %v2127
    %v2129 = vsub.f32 1.0, %v2125
    %v2130 = vmul.f32 %v2129, %v2128
    %v2131 = vmul.f32 %v2125, %v1875
    %v2132 = vadd.f32 %v2130, %v2131
    %v2134 = vrot.slane %v2132, 2
    %2135 = vrot.lane.b32.xlu0 %v2134, 32
    %v2136 = vpop.permute.xlu0 %2135
    %v2138 = vsel %vm233, %v1997, %v2136
    %v2140 = vrot.slane %v2138, 6
    %v2141 = vsel %vm475, %v2140, 0
    %2143 = vmatpush.msra.mxu0 0.0
    %2144 = vmatpush.msra.mxu0 0.0
    %2145 = vmatpush.msra.mxu0 0.0
    %2146 = vmatpush.msra.mxu0 0.0
    %2147 = vmatpush.msra.mxu0 0.0
    %2148 = vmatpush.msra.mxu0 0.0
    %2149 = vmatpush.msra.mxu0 0.0
    %2150 = vmatpush.msra.mxu0 0.0
    %2151 = vmatpush.msra.mxu0 %v221
    %2152 = vmatpush.msra.mxu0 %v217
    %2153 = vmatpush.msra.mxu0 %v213
    %2154 = vmatpush.msra.mxu0 %v209
    %2155 = vmatpush.msra.mxu0 %v205
    %2156 = vmatpush.msra.mxu0 %v201
    %2157 = vmatpush.msra.mxu0 %v197
    %2158 = vmatpush.msra.mxu0 %v193
    %2159 = vmatmul.f32.gmra.mxu0 %v2141
    %v2160 = vpop.f32.mrf.mxu0
    %v2161 = vadd.f32 %v467, %v2160
    %2162 = vdwg.mxu0
    %2163 = vmatpush.msra.mxu0 0.0
    %2164 = vmatpush.msra.mxu0 0.0
    %2165 = vmatpush.msra.mxu0 0.0
    %2166 = vmatpush.msra.mxu0 0.0
    %2167 = vmatpush.msra.mxu0 0.0
    %2168 = vmatpush.msra.mxu0 0.0
    %2169 = vmatpush.msra.mxu0 0.0
    %2170 = vmatpush.msra.mxu0 0.0
    %2171 = vmatpush.msra.mxu0 %v222
    %2172 = vmatpush.msra.mxu0 %v218
    %2173 = vmatpush.msra.mxu0 %v214
    %2174 = vmatpush.msra.mxu0 %v210
    %2175 = vmatpush.msra.mxu0 %v206
    %2176 = vmatpush.msra.mxu0 %v202
    %2177 = vmatpush.msra.mxu0 %v198
    %2178 = vmatpush.msra.mxu0 %v194
    %2179 = vmatmul.f32.gmra.mxu0 %v2141
    %v2180 = vpop.f32.mrf.mxu0
    %v2181 = vadd.f32 %v468, %v2180
    %2182 = vdwg.mxu0
    %2183 = vmatpush.msra.mxu0 0.0
    %2184 = vmatpush.msra.mxu0 0.0
    %2185 = vmatpush.msra.mxu0 0.0
    %2186 = vmatpush.msra.mxu0 0.0
    %2187 = vmatpush.msra.mxu0 0.0
    %2188 = vmatpush.msra.mxu0 0.0
    %2189 = vmatpush.msra.mxu0 0.0
    %2190 = vmatpush.msra.mxu0 0.0
    %2191 = vmatpush.msra.mxu0 %v223
    %2192 = vmatpush.msra.mxu0 %v219
    %2193 = vmatpush.msra.mxu0 %v215
    %2194 = vmatpush.msra.mxu0 %v211
    %2195 = vmatpush.msra.mxu0 %v207
    %2196 = vmatpush.msra.mxu0 %v203
    %2197 = vmatpush.msra.mxu0 %v199
    %2198 = vmatpush.msra.mxu0 %v195
    %2199 = vmatmul.f32.gmra.mxu0 %v2141
    %v2200 = vpop.f32.mrf.mxu0
    %v2201 = vadd.f32 %v469, %v2200
    %2202 = vdwg.mxu0
    %2203 = vmatpush.msra.mxu0 0.0
    %2204 = vmatpush.msra.mxu0 0.0
    %2205 = vmatpush.msra.mxu0 0.0
    %2206 = vmatpush.msra.mxu0 0.0
    %2207 = vmatpush.msra.mxu0 0.0
    %2208 = vmatpush.msra.mxu0 0.0
    %2209 = vmatpush.msra.mxu0 0.0
    %2210 = vmatpush.msra.mxu0 0.0
    %2211 = vmatpush.msra.mxu0 %v224
    %2212 = vmatpush.msra.mxu0 %v220
    %2213 = vmatpush.msra.mxu0 %v216
    %2214 = vmatpush.msra.mxu0 %v212
    %2215 = vmatpush.msra.mxu0 %v208
    %2216 = vmatpush.msra.mxu0 %v204
    %2217 = vmatpush.msra.mxu0 %v200
    %2218 = vmatpush.msra.mxu0 %v196
    %2219 = vmatmul.f32.gmra.mxu0 %v2141
    %v2220 = vpop.f32.mrf.mxu0
    %v2221 = vadd.f32 %v470, %v2220
    %2222 = vdwg.mxu0
    %v2223 = vxor.u32 %v2161, 2147483648
    %v2224 = vxor.u32 %v2181, 2147483648
    %v2225 = vmul.f32 %v2223, 1.442695
    %v2226 = vpow.pop %v2225
    %v2227 = vmul.f32 %v2224, 1.442695
    %v2228 = vpow.pop %v2227
    %v2229 = vadd.f32 %v2226, 1.0
    %v2230 = vadd.f32 %v2228, 1.0
    %v2231 = vrcp.pop %v2229
    %v2232 = vmul.f32 %v2229, %v2231
    %v2233 = vsub.f32 1.0, %v2232
    %v2234 = vmul.f32 %v2231, %v2233
    %v2235 = vadd.f32 %v2231, %v2234
    %vm2236 = vweird.f32 %v2229
    %vm2237 = vweird.f32 %v2231
    %vm2238 = vmor %vm2236, %vm2237
    %v2239 = vsel %vm2238, %v2231, %v2235
    %v2240 = vand.u32 2147483647, %v2229
    %vm2241 = vcmp.eq.f32.partialorder %v2240, 8.507059e+37
    %v2242 = vand.u32 %v2229, 2147483648
    %v2243 = vor.u32 1.1754944e-38, %v2242
    %v2244 = vsel %vm2241, %v2243, %v2239
    %v2245 = vmul.f32 1.0, %v2244
    %v2246 = vrcp.pop %v2230
    %v2247 = vmul.f32 %v2230, %v2246
    %v2248 = vsub.f32 1.0, %v2247
    %v2249 = vmul.f32 %v2246, %v2248
    %v2250 = vadd.f32 %v2246, %v2249
    %vm2251 = vweird.f32 %v2230
    %vm2252 = vweird.f32 %v2246
    %vm2253 = vmor %vm2251, %vm2252
    %v2254 = vsel %vm2253, %v2246, %v2250
    %v2255 = vand.u32 2147483647, %v2230
    %vm2256 = vcmp.eq.f32.partialorder %v2255, 8.507059e+37
    %v2257 = vand.u32 %v2230, 2147483648
    %v2258 = vor.u32 1.1754944e-38, %v2257
    %v2259 = vsel %vm2256, %v2258, %v2254
    %v2260 = vmul.f32 1.0, %v2259
    %v2261 = vmul.f32 %v2245, %v2221
    %v2262 = vadd.f32 %v2201, %v2261
    %v2263 = vtanh.pop %v2262
    %v2264 = vsub.f32 1.0, %v2260
    %v2265 = vmul.f32 %v2264, %v2263
    %v2266 = vmul.f32 %v2260, %v2132
    %v2267 = vadd.f32 %v2265, %v2266
    %v2268 = vrot.slane %v1875, 6
    %v2270 = vrot.slane %v2132, 4
    %v2273 = vrot.slane %v2267, 2
    %vm2275 = vcmask 1041408
    %v2276 = vsel %vm2275, %v1618, %v2268
    %vm2277 = vcmask 1043456
    %v2278 = vsel %vm2277, %v2276, %v2270
    %vm2279 = vcmask 1045504
    %v2280 = vsel %vm2279, %v2278, %v2273
    %v2281 = vld [vmem:[%s7] sm:$0xff]
    %v2282 = vld [vmem:[%s7 + $0x8] sm:$0xff]
    %v2283 = vld [vmem:[%s7 + $0x10] sm:$0xff]
    %v2284 = vld [vmem:[%s7 + $0x18] sm:$0xff]
    %v2285 = vld [vmem:[%s8] sm:$0x1]
    %v2287 = vperm.slane %v2285, 0
    %v2290 = vsel %vm233, %v2280, 0
    %2292 = vmatpush.msra.mxu0 0.0
    %2293 = vmatpush.msra.mxu0 0.0
    %2294 = vmatpush.msra.mxu0 0.0
    %2295 = vmatpush.msra.mxu0 0.0
    %2296 = vmatpush.msra.mxu0 0.0
    %2297 = vmatpush.msra.mxu0 0.0
    %2298 = vmatpush.msra.mxu0 0.0
    %2299 = vmatpush.msra.mxu0 0.0
    %2300 = vmatpush.msra.mxu0 0.0
    %2301 = vmatpush.msra.mxu0 0.0
    %2302 = vmatpush.msra.mxu0 0.0
    %2303 = vmatpush.msra.mxu0 0.0
    %2304 = vmatpush.msra.mxu0 %v2284
    %2305 = vmatpush.msra.mxu0 %v2283
    %2306 = vmatpush.msra.mxu0 %v2282
    %2307 = vmatpush.msra.mxu0 %v2281
    %2308 = vmatmul.f32.gmra.mxu0 %v2290
    %v2309 = vpop.f32.mrf.mxu0
    %v2310 = vadd.f32 %v2287, %v2309
    %2311 = vdwg.mxu0
    %2312 = vst [vmem:[%s9] sm:$0xff] %v2310
    // Predicated region
    $region54: #{gru_forward.1} parent=1 // pred_check
      _
    $region55: #{gru_forward.1} parent=1 // pred_check_branch
      %2314 = sbr.rel (0) target = $region57
    $region56: #{gru_forward.1} parent=1 // pred_region
      _
    $region57: #{gru_forward.1} parent=1 // pred_fallthru
      _
    // Predicated region
    $region58: #{gru_forward.1} parent=1 // pred_check
      _
    $region59: #{gru_forward.1} parent=1 // pred_check_branch
      %2316 = sbr.rel (0) target = $region61
    $region60: #{gru_forward.1} parent=1 // pred_region
      _
    $region61: #{gru_forward.1} parent=1 // pred_fallthru
      _
    %2317 = vsyncpa [#allocation3], 1
    %2318 = vsyncpa [#allocation5], 1
    %2319 = vsyncpa [#allocation8], 1

</llo_original>
